<compile_context>
chip_gen: v7x
topology: tpu7x:2x2x1
jax: 0.10.0
libtpu: 0.0.40
codegen_flags: <defaults>
</compile_context>

<pallas_src>
import functools

import jax
import jax.numpy as jnp
import numpy as np
from jax.experimental import pallas as pl
from jax.experimental.pallas import tpu as pltpu


def _round_up(x, m):
    return (x + m - 1) // m * m


def _double_fc_kernel(x_ref, w_ref, b_ref, out_ref, acc_ref):
    """One (M, N, K) tile of the fused double-head FC: acc += x @ w, finalize with bias+ReLU."""
    k = pl.program_id(2)

    @pl.when(k == 0)
    def _():
        acc_ref[...] = jnp.zeros_like(acc_ref)

    acc_ref[...] += jnp.dot(x_ref[...], w_ref[...],
                            preferred_element_type=jnp.float32)

    @pl.when(k == pl.num_programs(2) - 1)
    def _():
        out_ref[...] = jnp.maximum(acc_ref[...] + b_ref[...], 0.0).astype(out_ref.dtype)


@functools.partial(jax.jit,
                   static_argnames=("compute_dtype", "tile_m", "tile_n", "tile_k"))
def double_fc_pallas(x2d, w_cls, b_cls, w_reg, b_reg, *,
                     compute_dtype=jnp.bfloat16, tile_m=256, tile_n=512, tile_k=512):
    """loc_feat, cls_feat = relu(x @ w_reg.T + b_reg), relu(x @ w_cls.T + b_cls) (fused)."""
    out_dtype = x2d.dtype
    B, D = x2d.shape
    Fo = w_cls.shape[0]
    N2 = 2 * Fo

    cdt = jnp.dtype(compute_dtype)
    c_item = cdt.itemsize
    o_item = jnp.dtype(out_dtype).itemsize

    # Fuse both heads into a single pre-transposed weight stream [D, 2*Fo] (loc first, cls second).
    w = jnp.concatenate([w_reg, w_cls], axis=0).T.astype(compute_dtype)          # [D, 2*Fo]
    b = jnp.concatenate([b_reg, b_cls], axis=0).astype(jnp.float32)[None, :]     # [1, 2*Fo]
    x = x2d.astype(compute_dtype)

    # Tile sizes (lane/sublane aligned) and padded problem sizes.
    sub = 8 * (4 // c_item)                               # f32 -> 8 rows, bf16 -> 16 rows
    TM = min(_round_up(tile_m, sub), _round_up(B, sub))
    TK = min(_round_up(tile_k, 128), _round_up(D, 128))
    TN = min(_round_up(tile_n, 128), _round_up(N2, 128))
    Bp = _round_up(B, TM)
    Dp = _round_up(D, TK)
    Np = _round_up(N2, TN)

    x = jnp.pad(x, ((0, Bp - B), (0, Dp - D)))
    w = jnp.pad(w, ((0, Dp - D), (0, Np - N2)))
    b = jnp.pad(b, ((0, 0), (0, Np - N2)))

    grid = (Bp // TM, Np // TN, Dp // TK)                 # K (reduction) is the last axis

    cost = pl.CostEstimate(
        flops=2 * Bp * Np * Dp,
        transcendentals=0,
        bytes_accessed=(Bp * Dp * c_item + Dp * Np * c_item
                        + Np * 4 + Bp * Np * o_item),
    )

    out = pl.pallas_call(
        _double_fc_kernel,
        grid=grid,
        in_specs=[
            pl.BlockSpec((TM, TK), lambda m, n, k: (m, k)),   # activations
            pl.BlockSpec((TK, TN), lambda m, n, k: (k, n)),   # fused weights
            pl.BlockSpec((1, TN), lambda m, n, k: (0, n)),    # fused bias
        ],
        out_specs=pl.BlockSpec((TM, TN), lambda m, n, k: (m, n)),  # resident across K
        out_shape=jax.ShapeDtypeStruct((Bp, Np), out_dtype),
        scratch_shapes=[pltpu.VMEM((TM, TN), jnp.float32)],
        compiler_params=pltpu.CompilerParams(
            dimension_semantics=("parallel", "parallel", "arbitrary"),
            vmem_limit_bytes=48 * 1024 * 1024,
        ),
        cost_estimate=cost,
    )(x, w, b)

    out = out[:B]
    loc_feat = out[:, :Fo]
    cls_feat = out[:, Fo:N2]
    return loc_feat, cls_feat


def _c2_xavier_fill(key, out_f, in_f, dtype=jnp.float32):
    # weight_init.c2_xavier_fill == kaiming_uniform_(a=1): U(+-sqrt(3/fan_in)), bias = 0
    bound = float(np.sqrt(3.0 / in_f))
    w = jax.random.uniform(key, (out_f, in_f), dtype, minval=-bound, maxval=bound)
    b = jnp.zeros((out_f,), dtype)
    return w, b


class FastRCNNDoubleHeadPallas:
    def __init__(self, key, in_channels, height, width, num_fc, fc_dim,
                 compute_dtype=jnp.bfloat16):
        assert num_fc > 0
        self.compute_dtype = compute_dtype
        self._output_size = in_channels * height * width
        self.fcs = []       # classification head fcs
        self.fcs_reg = []   # regression head fcs (see TODO above)
        out_size = self._output_size
        keys = jax.random.split(key, 2 * num_fc)
        for k in range(num_fc):
            self.fcs.append(_c2_xavier_fill(keys[2 * k], fc_dim, out_size))
            self.fcs_reg.append(_c2_xavier_fill(keys[2 * k + 1], fc_dim, out_size))
            out_size = fc_dim
        self._output_size = out_size

    def forward(self, x):
        B = x.shape[0]
        x2d = x.reshape(B, -1)                     # torch.flatten(x, start_dim=1)
        # In the PyTorch loops every fc is applied to the *original* x and the result is
        # overwritten each iteration, so only the last fc of each head affects the output.
        # Run a single fused kernel call on the last pair (bit-identical, no dead work).
        w_c, b_c = self.fcs[-1]
        w_r, b_r = self.fcs_reg[-1]
        return double_fc_pallas(x2d, w_c, b_c, w_r, b_r,
                                compute_dtype=self.compute_dtype)

    @property
    def output_size(self):
        return self._output_size


if __name__ == "__main__":
    key = jax.random.PRNGKey(0)
    k_x, k_p = jax.random.split(key)

    # Small, self-consistent shapes. The PyTorch forward applies every fc directly to the
    # flattened x, so C*H*W must equal FC_DIM for num_fc > 1.
    B, C, H, W = 2, 4, 16, 16
    NUM_FC = 2
    FC_DIM = C * H * W                             # 1024

    x = jax.random.normal(k_x, (B, C, H, W), jnp.float32)

    head = FastRCNNDoubleHeadPallas(k_p, C, H, W, NUM_FC, FC_DIM)
    loc_feat, cls_feat = head.forward(x)
    jax.block_until_ready((loc_feat, cls_feat))

    # Pure-JAX reference with the same numeric recipe (bf16 operands, f32 accumulation),
    # applied to the last fc of each head (the only one that survives the PyTorch loops).
    x2d = x.reshape(B, -1)
    w_c, b_c = head.fcs[-1]
    w_r, b_r = head.fcs_reg[-1]
    xb = x2d.astype(jnp.bfloat16)
    cls_ref = jnp.maximum(
        jnp.dot(xb, w_c.astype(jnp.bfloat16).T, preferred_element_type=jnp.float32) + b_c, 0.0)
    loc_ref = jnp.maximum(
        jnp.dot(xb, w_r.astype(jnp.bfloat16).T, preferred_element_type=jnp.float32) + b_r, 0.0)

    assert cls_feat.shape == (B, FC_DIM) and loc_feat.shape == (B, FC_DIM)
    np.testing.assert_allclose(np.asarray(cls_feat), np.asarray(cls_ref), rtol=2e-3, atol=2e-3)
    np.testing.assert_allclose(np.asarray(loc_feat), np.asarray(loc_ref), rtol=2e-3, atol=2e-3)

    print("KERNEL_OK")
</pallas_src>

<mosaic_0001>
module attributes {stable_mosaic.version = 11 : i64} {
  func.func @_double_fc_kernel(%arg0: i32, %arg1: i32, %arg2: i32, %arg3: memref<16x512xbf16, #tpu.memory_space<vmem>>, %arg4: memref<512x512xbf16, #tpu.memory_space<vmem>>, %arg5: memref<1x512xf32, #tpu.memory_space<vmem>>, %arg6: memref<16x512xf32, #tpu.memory_space<vmem>>, %arg7: memref<16x512xf32, #tpu.memory_space<vmem>>) attributes {dimension_semantics = [#tpu.dimension_semantics<parallel>, #tpu.dimension_semantics<parallel>, #tpu.dimension_semantics<arbitrary>], iteration_bounds = array<i64: 1, 4, 2>, scalar_prefetch = 0 : i64, scratch_operands = 1 : i64, tpu.core_type = #tpu.core_type<tc>, window_params = [{transform_indices = @transform_0, window_bounds = array<i64: 16, 512>}, {transform_indices = @transform_1, window_bounds = array<i64: 512, 512>}, {transform_indices = @transform_2, window_bounds = array<i64: 1, 512>}, {transform_indices = @transform_3, window_bounds = array<i64: 16, 512>}]} {
    %c0_i32 = arith.constant 0 : i32
    %0 = arith.cmpi eq, %arg2, %c0_i32 : i32
    %1 = arith.extui %0 : i1 to i32
    %c0_i32_0 = arith.constant 0 : i32
    %2 = arith.cmpi ne, %1, %c0_i32_0 : i32
    scf.if %2 {
      %cst_9 = arith.constant 0.000000e+00 : f32
      %12 = vector.broadcast %cst_9 : f32 to vector<16x512xf32>
      %c0_10 = arith.constant 0 : index
      %c0_11 = arith.constant 0 : index
      %13 = vector.load %arg7[%c0_10, %c0_11] : memref<16x512xf32, #tpu.memory_space<vmem>>, vector<16x512xf32>
      tpu.vector_store %arg7[%c0_10, %c0_11], %12 {strides = array<i32>} : memref<16x512xf32, #tpu.memory_space<vmem>>, vector<16x512xf32>,
    } else {
    }
    %c0 = arith.constant 0 : index
    %c0_1 = arith.constant 0 : index
    %3 = vector.load %arg7[%c0, %c0_1] : memref<16x512xf32, #tpu.memory_space<vmem>>, vector<16x512xf32>
    %c0_2 = arith.constant 0 : index
    %c0_3 = arith.constant 0 : index
    %4 = vector.load %arg3[%c0_2, %c0_3] : memref<16x512xbf16, #tpu.memory_space<vmem>>, vector<16x512xbf16>
    %c0_4 = arith.constant 0 : index
    %c0_5 = arith.constant 0 : index
    %5 = vector.load %arg4[%c0_4, %c0_5] : memref<512x512xbf16, #tpu.memory_space<vmem>>, vector<512x512xbf16>
    %cst = arith.constant dense<0.000000e+00> : vector<16x512xf32>
    %6 = tpu.matmul %4, %5, %cst {dimension_numbers = #tpu.dot_dimension_numbers<[1], [0], [0], [1], [0, 0, 1, 1], [], []>} : vector<16x512xbf16>, vector<512x512xbf16>, vector<16x512xf32> -> vector<16x512xf32>
    %7 = arith.addf %3, %6 : vector<16x512xf32>
    %c0_6 = arith.constant 0 : index
    %c0_7 = arith.constant 0 : index
    %8 = vector.load %arg7[%c0_6, %c0_7] : memref<16x512xf32, #tpu.memory_space<vmem>>, vector<16x512xf32>
    tpu.vector_store %arg7[%c0_6, %c0_7], %7 {strides = array<i32>} : memref<16x512xf32, #tpu.memory_space<vmem>>, vector<16x512xf32>,
    %c1_i32 = arith.constant 1 : i32
    %9 = arith.cmpi eq, %arg2, %c1_i32 : i32
    %10 = arith.extui %9 : i1 to i32
    %c0_i32_8 = arith.constant 0 : i32
    %11 = arith.cmpi ne, %10, %c0_i32_8 : i32
    scf.if %11 {
      %c0_9 = arith.constant 0 : index
      %c0_10 = arith.constant 0 : index
      %12 = vector.load %arg7[%c0_9, %c0_10] : memref<16x512xf32, #tpu.memory_space<vmem>>, vector<16x512xf32>
      %c0_11 = arith.constant 0 : index
      %c0_12 = arith.constant 0 : index
      %13 = vector.load %arg5[%c0_11, %c0_12] : memref<1x512xf32, #tpu.memory_space<vmem>>, vector<1x512xf32>
      %14 = vector.broadcast %13 : vector<1x512xf32> to vector<16x512xf32>
      %15 = arith.addf %12, %14 : vector<16x512xf32>
      %cst_13 = arith.constant 0.000000e+00 : f32
      %16 = vector.broadcast %cst_13 : f32 to vector<16x512xf32>
      %17 = arith.maximumf %15, %16 : vector<16x512xf32>
      %c0_14 = arith.constant 0 : index
      %c0_15 = arith.constant 0 : index
      %18 = vector.load %arg6[%c0_14, %c0_15] : memref<16x512xf32, #tpu.memory_space<vmem>>, vector<16x512xf32>
      tpu.vector_store %arg6[%c0_14, %c0_15], %17 {strides = array<i32>} : memref<16x512xf32, #tpu.memory_space<vmem>>, vector<16x512xf32>,
    } else {
    }
    return
  }
  func.func @transform_0(%arg0: i32, %arg1: i32, %arg2: i32) -> (i32, i32) {
    %c0_i32 = arith.constant 0 : i32
    return %arg0, %arg2 : i32, i32
  }
  func.func @transform_1(%arg0: i32, %arg1: i32, %arg2: i32) -> (i32, i32) {
    %c0_i32 = arith.constant 0 : i32
    return %arg2, %arg1 : i32, i32
  }
  func.func @transform_2(%arg0: i32, %arg1: i32, %arg2: i32) -> (i32, i32) {
    %c0_i32 = arith.constant 0 : i32
    %c0_i32_0 = arith.constant 0 : i32
    return %c0_i32, %arg1 : i32, i32
  }
  func.func @transform_3(%arg0: i32, %arg1: i32, %arg2: i32) -> (i32, i32) {
    %c0_i32 = arith.constant 0 : i32
    return %arg0, %arg1 : i32, i32
  }
}

</mosaic_0001>

<llo_original>
// kernel: double_fc_pallas.1
$region0: #{double_fc_pallas.1}
  #allocation0 [shape = 'u32[]', space=smem, size = 0x4, offset = 0x4, fixed_abs, tag = 'smem constant byte address 0x4 - core index']
  #allocation1 [shape = 'u32[144,128]{1,0:T(1,128)}', space=vmem, size = 0x12000, scoped, tag = 'internal scratch']
  #allocation2 [shape = 'f32[16,512]{1,0:T(8,128)}', space=vmem, size = 0x8000, scoped, tag = 'scratch operand']
  %s0 = inlined_call_operand.vmem [shape: bf16[16,1024], index: 0, kind: input, shape index: {}]
  %s1 = inlined_call_operand.vmem [shape: bf16[1024,2048], index: 1, kind: input, shape index: {}]
  %s2 = inlined_call_operand.vmem [shape: f32[1,2048], index: 2, kind: input, shape index: {}]
  %s3 = inlined_call_operand.vmem [shape: f32[16,2048], index: 3, kind: output, shape index: {}]
  %s4 = sld [smem:[#allocation0]]
  $region118: #{double_fc_pallas.1} parent=0
    _
  %s6 = ssub.s32 1, %s4
  %s7 = scalar_select 0, %s6, %s4
  $region1: #{double_fc_pallas.1} parent=0
    #allocation3 [shape = 'u8[32768]{0}', space=vmem, size = 0x8000, scoped, tag = 'input window, operand 0']
    #allocation4 [shape = 'u8[1048576]{0}', space=vmem, size = 0x100000, scoped, tag = 'input window, operand 1']
    #allocation5 [shape = 'u8[65536]{0}', space=vmem, size = 0x10000, scoped, tag = 'output window, operand 0']
    loop: start=0, step=1, limit=10
    $region2: #{double_fc_pallas.1} parent=1 // loop_pre_header
      _
    $region3: #{double_fc_pallas.1} parent=1 // loop_header
      %s9 = sphi 0, %s13
      %p10 = scmp.ge.s32.totalorder %s9, 10
      %s16 = sphi 0, %s35
      %s17 = sphi 0, %s31
      %s18 = sphi 0, %s27
      %s19 = sphi 0, %s16
      %s20 = sphi 0, %s17
      %s21 = sphi 0, %s18
      %s22 = sphi 0, %s19
      %s23 = sphi 0, %s20
      %s24 = sphi 0, %s21
      %s40 = sphi 0, %s42
      %s43 = sphi 0, %s40
      %s44 = sphi 0, %s43
      %s60 = sphi 0, %s44
      %s68 = sphi 0, %s70
      %s71 = sphi 0, %s68
      %s72 = sphi 0, %s71
      %s88 = sphi 0, %s72
      %s94 = sphi 0, %s96
      %s97 = sphi 0, %s94
      %s98 = sphi 0, %s97
      %s114 = sphi 0, %s98
      %s122 = sphi 0, %s124
      %s125 = sphi 0, %s122
      %s126 = sphi 0, %s125
      %s142 = sphi 0, %s126
    $region4: #{double_fc_pallas.1} parent=1 // loop_header_branch
      %12 = sbr.rel (%p10) target = $region8
    $region5: #{double_fc_pallas.1} parent=1 // loop_body
      %s14 = ssub.s32 %s9, 1
      %s15 = ssub.s32 %s9, 2
      %s25 = sadd.s32 1, %s18
      %p26 = scmp.ge.s32.totalorder %s25, 2
      %s27 = scalar_select %p26, 0, %s25
      %s28 = sadd.s32 1, %s17
      %s29 = scalar_select %p26, %s28, %s17
      %p30 = scmp.ge.s32.totalorder %s29, 4
      %s31 = scalar_select %p30, 0, %s29
      %s32 = sadd.s32 1, %s16
      %s33 = scalar_select %p30, %s32, %s16
      %p34 = scmp.ge.s32.totalorder %s33, 1
      %s35 = scalar_select %p34, 0, %s33
      %s36 = ssub.s32 %s16, %s35
      %s37 = ssub.s32 %s18, %s27
      %s38 = sor.u32 %s36, %s37
      %p39 = scmp.eq.s32.totalorder %s38, 0
      %s41 = sadd.s32 %s40, 1
      %s42 = scalar_select %p39, %s40, %s41
      %p45 = pneg %p39
      %p46 = scmp.eq.s32.totalorder %s9, 7
      %p47 = por %p45, %p46
      %p48 = scmp.ne.s32.totalorder %s40, %s43
      %p49 = scmp.eq.s32.totalorder %s9, 0
      %p50 = por %p48, %p49
      %p51 = scmp.ne.s32.totalorder %s40, %s43
      %p52 = scmp.eq.s32.totalorder %s14, 7
      %p53 = por %p51, %p52
      %p54 = scmp.ne.s32.totalorder %s43, %s44
      %p55 = scmp.eq.s32.totalorder %s14, 0
      %p56 = por %p54, %p55
      %p57 = scmp.ne.s32.totalorder %s43, %s44
      %p58 = scmp.eq.s32.totalorder %s15, 7
      %p59 = por %p57, %p58
      %p61 = scmp.ne.s32.totalorder %s44, %s60
      %p62 = scmp.eq.s32.totalorder %s15, 0
      %p63 = por %p61, %p62
      %s64 = ssub.s32 %s18, %s27
      %s65 = ssub.s32 %s17, %s31
      %s66 = sor.u32 %s64, %s65
      %p67 = scmp.eq.s32.totalorder %s66, 0
      %s69 = sadd.s32 %s68, 1
      %s70 = scalar_select %p67, %s68, %s69
      %p73 = pneg %p67
      %p74 = scmp.eq.s32.totalorder %s9, 7
      %p75 = por %p73, %p74
      %p76 = scmp.ne.s32.totalorder %s68, %s71
      %p77 = scmp.eq.s32.totalorder %s9, 0
      %p78 = por %p76, %p77
      %p79 = scmp.ne.s32.totalorder %s68, %s71
      %p80 = scmp.eq.s32.totalorder %s14, 7
      %p81 = por %p79, %p80
      %p82 = scmp.ne.s32.totalorder %s71, %s72
      %p83 = scmp.eq.s32.totalorder %s14, 0
      %p84 = por %p82, %p83
      %p85 = scmp.ne.s32.totalorder %s71, %s72
      %p86 = scmp.eq.s32.totalorder %s15, 7
      %p87 = por %p85, %p86
      %p89 = scmp.ne.s32.totalorder %s72, %s88
      %p90 = scmp.eq.s32.totalorder %s15, 0
      %p91 = por %p89, %p90
      %s92 = ssub.s32 %s17, %s31
      %p93 = scmp.eq.s32.totalorder %s92, 0
      %s95 = sadd.s32 %s94, 1
      %s96 = scalar_select %p93, %s94, %s95
      %p99 = pneg %p93
      %p100 = scmp.eq.s32.totalorder %s9, 7
      %p101 = por %p99, %p100
      %p102 = scmp.ne.s32.totalorder %s94, %s97
      %p103 = scmp.eq.s32.totalorder %s9, 0
      %p104 = por %p102, %p103
      %p105 = scmp.ne.s32.totalorder %s94, %s97
      %p106 = scmp.eq.s32.totalorder %s14, 7
      %p107 = por %p105, %p106
      %p108 = scmp.ne.s32.totalorder %s97, %s98
      %p109 = scmp.eq.s32.totalorder %s14, 0
      %p110 = por %p108, %p109
      %p111 = scmp.ne.s32.totalorder %s97, %s98
      %p112 = scmp.eq.s32.totalorder %s15, 7
      %p113 = por %p111, %p112
      %p115 = scmp.ne.s32.totalorder %s98, %s114
      %p116 = scmp.eq.s32.totalorder %s15, 0
      %p117 = por %p115, %p116
      %s118 = ssub.s32 %s16, %s35
      %s119 = ssub.s32 %s17, %s31
      %s120 = sor.u32 %s118, %s119
      %p121 = scmp.eq.s32.totalorder %s120, 0
      %s123 = sadd.s32 %s122, 1
      %s124 = scalar_select %p121, %s122, %s123
      %p127 = pneg %p121
      %p128 = scmp.eq.s32.totalorder %s9, 7
      %p129 = por %p127, %p128
      %p130 = scmp.ne.s32.totalorder %s122, %s125
      %p131 = scmp.eq.s32.totalorder %s9, 0
      %p132 = por %p130, %p131
      %p133 = scmp.ne.s32.totalorder %s122, %s125
      %p134 = scmp.eq.s32.totalorder %s14, 7
      %p135 = por %p133, %p134
      %p136 = scmp.ne.s32.totalorder %s125, %s126
      %p137 = scmp.eq.s32.totalorder %s14, 0
      %p138 = por %p136, %p137
      %p139 = scmp.ne.s32.totalorder %s125, %s126
      %p140 = scmp.eq.s32.totalorder %s15, 7
      %p141 = por %p139, %p140
      %p143 = scmp.ne.s32.totalorder %s126, %s142
      %p144 = scmp.eq.s32.totalorder %s15, 0
      %p145 = por %p143, %p144
      %p146 = scmp.le.s32.totalorder 1, %s9
      %p147 = scmp.lt.s32.totalorder %s9, 9
      %p148 = pnand %p146, %p147
      %p149 = pneg %p148
      // Predicated region
      $region9: #{double_fc_pallas.1} parent=5 // pred_check
        _
      $region10: #{double_fc_pallas.1} parent=5 // pred_check_branch
        %151 = sbr.rel (%p148) target = $region12
      $region11: #{double_fc_pallas.1} parent=5 // pred_region
        %s152 = ssub.s32 %s9, 1
      $region12: #{double_fc_pallas.1} parent=5 // pred_fallthru
        _
      %p153 = scmp.lt.s32.totalorder %s9, 8
      // Predicated region
      $region13: #{double_fc_pallas.1} parent=5 // pred_check
        %p154 = pneg %p153
      $region14: #{double_fc_pallas.1} parent=5 // pred_check_branch
        %156 = sbr.rel (%p154) target = $region16
      $region15: #{double_fc_pallas.1} parent=5 // pred_region
        // Predicated region
        $region17: #{double_fc_pallas.1} parent=15 // pred_check
          %p157 = pneg %p50
        $region18: #{double_fc_pallas.1} parent=15 // pred_check_branch
          %159 = sbr.rel (%p157) target = $region20
        $region19: #{double_fc_pallas.1} parent=15 // pred_region
          %s160 = sand.u32 %s40, 1
          %s161 = sand.u32 %s40, 1
          %s162 = smul.addr %s161, 32
          %s163 = scalar_lea.vmem [#allocation3], %s162
          %s164 = smul.u32 2, %s16
          %s165 = smul.u32 4, %s18
          %s166 = smul.addr %s164, 8
          %s167 = sadd.s32 %s165, %s166
          %s168 = smul.addr %s167, 4
          %s169 = scalar_lea.vmem %s0, %s168
          // Predicated region
          $region21: #{double_fc_pallas.1} parent=19 // pred_check
            _
          $region22: #{double_fc_pallas.1} parent=19 // pred_check_branch
            %171 = sbr.rel (0) target = $region24
          $region23: #{double_fc_pallas.1} parent=19 // pred_region
            // Predicated region
            $region25: #{double_fc_pallas.1} parent=23 // pred_check
              _
            $region26: #{double_fc_pallas.1} parent=23 // pred_check_branch
              %173 = sbr.rel (0) target = $region28
            $region27: #{double_fc_pallas.1} parent=23 // pred_region
              loop: start=0, step=1, limit=1
              $region29: #{double_fc_pallas.1} parent=27 // loop_pre_header
                _
              $region30: #{double_fc_pallas.1} parent=27 // loop_header
                %s175 = sphi 0, %s179
                %p176 = scmp.ge.s32.totalorder %s175, 1
                %s180 = sphi %s169, %s169
                %s181 = sphi %s163, %s163
              $region31: #{double_fc_pallas.1} parent=27 // loop_header_branch
                %178 = sbr.rel (%p176) target = $region35
              $region32: #{double_fc_pallas.1} parent=27 // loop_body
                %v182 = vld [vmem:[%s180] sm:$0xff]
                %183 = vst [vmem:[%s181] sm:$0xff] %v182
                %v184 = vld [vmem:[%s180 + $0x8] sm:$0xff]
                %185 = vst [vmem:[%s181 + $0x8] sm:$0xff] %v184
                %v186 = vld [vmem:[%s180 + $0x20] sm:$0xff]
                %187 = vst [vmem:[%s181 + $0x10] sm:$0xff] %v186
                %v188 = vld [vmem:[%s180 + $0x28] sm:$0xff]
                %189 = vst [vmem:[%s181 + $0x18] sm:$0xff] %v188
              $region33: #{double_fc_pallas.1} parent=27 // loop_footer
                %s179 = sadd.s32 1, %s175
              $region34: #{double_fc_pallas.1} parent=27 // loop_footer_branch
                %174 = sbr.rel target = $region30
              $region35: #{double_fc_pallas.1} parent=27 // loop_exit
                _
            $region28: #{double_fc_pallas.1} parent=23 // pred_fallthru
              _
            // Predicated region
            $region36: #{double_fc_pallas.1} parent=23 // pred_check
              _
            $region37: #{double_fc_pallas.1} parent=23 // pred_check_branch
              %191 = sbr.rel target = $region39
            $region38: #{double_fc_pallas.1} parent=23 // pred_region
              _
            $region39: #{double_fc_pallas.1} parent=23 // pred_fallthru
              _
          $region24: #{double_fc_pallas.1} parent=19 // pred_fallthru
            _
          %192 = vnop
        $region20: #{double_fc_pallas.1} parent=15 // pred_fallthru
          _
        // Predicated region
        $region40: #{double_fc_pallas.1} parent=15 // pred_check
          %p193 = pneg %p78
        $region41: #{double_fc_pallas.1} parent=15 // pred_check_branch
          %195 = sbr.rel (%p193) target = $region43
        $region42: #{double_fc_pallas.1} parent=15 // pred_region
          %s196 = sand.u32 %s68, 1
          %s197 = sand.u32 %s68, 1
          %s198 = smul.addr %s197, 1024
          %s199 = scalar_lea.vmem [#allocation4], %s198
          %s200 = smul.u32 64, %s18
          %s201 = smul.u32 4, %s17
          %s202 = smul.addr %s200, 16
          %s203 = sadd.s32 %s201, %s202
          %s204 = smul.addr %s203, 4
          %s205 = scalar_lea.vmem %s1, %s204
          // Predicated region
          $region44: #{double_fc_pallas.1} parent=42 // pred_check
            _
          $region45: #{double_fc_pallas.1} parent=42 // pred_check_branch
            %207 = sbr.rel (0) target = $region47
          $region46: #{double_fc_pallas.1} parent=42 // pred_region
            // Predicated region
            $region48: #{double_fc_pallas.1} parent=46 // pred_check
              _
            $region49: #{double_fc_pallas.1} parent=46 // pred_check_branch
              %209 = sbr.rel (0) target = $region51
            $region50: #{double_fc_pallas.1} parent=46 // pred_region
              loop: start=0, step=1, limit=1
              $region52: #{double_fc_pallas.1} parent=50 // loop_pre_header
                _
              $region53: #{double_fc_pallas.1} parent=50 // loop_header
                %s211 = sphi 0, %s215
                %p212 = scmp.ge.s32.totalorder %s211, 1
                %s216 = sphi %s205, %s205
                %s217 = sphi %s199, %s199
              $region54: #{double_fc_pallas.1} parent=50 // loop_header_branch
                %214 = sbr.rel (%p212) target = $region58
              $region55: #{double_fc_pallas.1} parent=50 // loop_body
                %v218 = vld [vmem:[%s216] sm:$0xff]
                %219 = vst [vmem:[%s217] sm:$0xff] %v218
                %v220 = vld [vmem:[%s216 + $0x8] sm:$0xff]
                %221 = vst [vmem:[%s217 + $0x8] sm:$0xff] %v220
                %v222 = vld [vmem:[%s216 + $0x40] sm:$0xff]
                %223 = vst [vmem:[%s217 + $0x10] sm:$0xff] %v222
                %v224 = vld [vmem:[%s216 + $0x48] sm:$0xff]
                %225 = vst [vmem:[%s217 + $0x18] sm:$0xff] %v224
                %v226 = vld [vmem:[%s216 + $0x80] sm:$0xff]
                %227 = vst [vmem:[%s217 + $0x20] sm:$0xff] %v226
                %v228 = vld [vmem:[%s216 + $0x88] sm:$0xff]
                %229 = vst [vmem:[%s217 + $0x28] sm:$0xff] %v228
                %v230 = vld [vmem:[%s216 + $0xc0] sm:$0xff]
                %231 = vst [vmem:[%s217 + $0x30] sm:$0xff] %v230
                %v232 = vld [vmem:[%s216 + $0xc8] sm:$0xff]
                %233 = vst [vmem:[%s217 + $0x38] sm:$0xff] %v232
                %v234 = vld [vmem:[%s216 + $0x100] sm:$0xff]
                %235 = vst [vmem:[%s217 + $0x40] sm:$0xff] %v234
                %v236 = vld [vmem:[%s216 + $0x108] sm:$0xff]
                %237 = vst [vmem:[%s217 + $0x48] sm:$0xff] %v236
                %v238 = vld [vmem:[%s216 + $0x140] sm:$0xff]
                %239 = vst [vmem:[%s217 + $0x50] sm:$0xff] %v238
                %v240 = vld [vmem:[%s216 + $0x148] sm:$0xff]
                %241 = vst [vmem:[%s217 + $0x58] sm:$0xff] %v240
                %v242 = vld [vmem:[%s216 + $0x180] sm:$0xff]
                %243 = vst [vmem:[%s217 + $0x60] sm:$0xff] %v242
                %v244 = vld [vmem:[%s216 + $0x188] sm:$0xff]
                %245 = vst [vmem:[%s217 + $0x68] sm:$0xff] %v244
                %v246 = vld [vmem:[%s216 + $0x1c0] sm:$0xff]
                %247 = vst [vmem:[%s217 + $0x70] sm:$0xff] %v246
                %v248 = vld [vmem:[%s216 + $0x1c8] sm:$0xff]
                %249 = vst [vmem:[%s217 + $0x78] sm:$0xff] %v248
                %v250 = vld [vmem:[%s216 + $0x200] sm:$0xff]
                %251 = vst [vmem:[%s217 + $0x80] sm:$0xff] %v250
                %v252 = vld [vmem:[%s216 + $0x208] sm:$0xff]
                %253 = vst [vmem:[%s217 + $0x88] sm:$0xff] %v252
                %v254 = vld [vmem:[%s216 + $0x240] sm:$0xff]
                %255 = vst [vmem:[%s217 + $0x90] sm:$0xff] %v254
                %v256 = vld [vmem:[%s216 + $0x248] sm:$0xff]
                %257 = vst [vmem:[%s217 + $0x98] sm:$0xff] %v256
                %v258 = vld [vmem:[%s216 + $0x280] sm:$0xff]
                %259 = vst [vmem:[%s217 + $0xa0] sm:$0xff] %v258
                %v260 = vld [vmem:[%s216 + $0x288] sm:$0xff]
                %261 = vst [vmem:[%s217 + $0xa8] sm:$0xff] %v260
                %v262 = vld [vmem:[%s216 + $0x2c0] sm:$0xff]
                %263 = vst [vmem:[%s217 + $0xb0] sm:$0xff] %v262
                %v264 = vld [vmem:[%s216 + $0x2c8] sm:$0xff]
                %265 = vst [vmem:[%s217 + $0xb8] sm:$0xff] %v264
                %v266 = vld [vmem:[%s216 + $0x300] sm:$0xff]
                %267 = vst [vmem:[%s217 + $0xc0] sm:$0xff] %v266
                %v268 = vld [vmem:[%s216 + $0x308] sm:$0xff]
                %269 = vst [vmem:[%s217 + $0xc8] sm:$0xff] %v268
                %v270 = vld [vmem:[%s216 + $0x340] sm:$0xff]
                %271 = vst [vmem:[%s217 + $0xd0] sm:$0xff] %v270
                %v272 = vld [vmem:[%s216 + $0x348] sm:$0xff]
                %273 = vst [vmem:[%s217 + $0xd8] sm:$0xff] %v272
                %v274 = vld [vmem:[%s216 + $0x380] sm:$0xff]
                %275 = vst [vmem:[%s217 + $0xe0] sm:$0xff] %v274
                %v276 = vld [vmem:[%s216 + $0x388] sm:$0xff]
                %277 = vst [vmem:[%s217 + $0xe8] sm:$0xff] %v276
                %v278 = vld [vmem:[%s216 + $0x3c0] sm:$0xff]
                %279 = vst [vmem:[%s217 + $0xf0] sm:$0xff] %v278
                %v280 = vld [vmem:[%s216 + $0x3c8] sm:$0xff]
                %281 = vst [vmem:[%s217 + $0xf8] sm:$0xff] %v280
                %v282 = vld [vmem:[%s216 + $0x400] sm:$0xff]
                %283 = vst [vmem:[%s217 + $0x100] sm:$0xff] %v282
                %v284 = vld [vmem:[%s216 + $0x408] sm:$0xff]
                %285 = vst [vmem:[%s217 + $0x108] sm:$0xff] %v284
                %v286 = vld [vmem:[%s216 + $0x440] sm:$0xff]
                %287 = vst [vmem:[%s217 + $0x110] sm:$0xff] %v286
                %v288 = vld [vmem:[%s216 + $0x448] sm:$0xff]
                %289 = vst [vmem:[%s217 + $0x118] sm:$0xff] %v288
                %v290 = vld [vmem:[%s216 + $0x480] sm:$0xff]
                %291 = vst [vmem:[%s217 + $0x120] sm:$0xff] %v290
                %v292 = vld [vmem:[%s216 + $0x488] sm:$0xff]
                %293 = vst [vmem:[%s217 + $0x128] sm:$0xff] %v292
                %v294 = vld [vmem:[%s216 + $0x4c0] sm:$0xff]
                %295 = vst [vmem:[%s217 + $0x130] sm:$0xff] %v294
                %v296 = vld [vmem:[%s216 + $0x4c8] sm:$0xff]
                %297 = vst [vmem:[%s217 + $0x138] sm:$0xff] %v296
                %v298 = vld [vmem:[%s216 + $0x500] sm:$0xff]
                %299 = vst [vmem:[%s217 + $0x140] sm:$0xff] %v298
                %v300 = vld [vmem:[%s216 + $0x508] sm:$0xff]
                %301 = vst [vmem:[%s217 + $0x148] sm:$0xff] %v300
                %v302 = vld [vmem:[%s216 + $0x540] sm:$0xff]
                %303 = vst [vmem:[%s217 + $0x150] sm:$0xff] %v302
                %v304 = vld [vmem:[%s216 + $0x548] sm:$0xff]
                %305 = vst [vmem:[%s217 + $0x158] sm:$0xff] %v304
                %v306 = vld [vmem:[%s216 + $0x580] sm:$0xff]
                %307 = vst [vmem:[%s217 + $0x160] sm:$0xff] %v306
                %v308 = vld [vmem:[%s216 + $0x588] sm:$0xff]
                %309 = vst [vmem:[%s217 + $0x168] sm:$0xff] %v308
                %v310 = vld [vmem:[%s216 + $0x5c0] sm:$0xff]
                %311 = vst [vmem:[%s217 + $0x170] sm:$0xff] %v310
                %v312 = vld [vmem:[%s216 + $0x5c8] sm:$0xff]
                %313 = vst [vmem:[%s217 + $0x178] sm:$0xff] %v312
                %v314 = vld [vmem:[%s216 + $0x600] sm:$0xff]
                %315 = vst [vmem:[%s217 + $0x180] sm:$0xff] %v314
                %v316 = vld [vmem:[%s216 + $0x608] sm:$0xff]
                %317 = vst [vmem:[%s217 + $0x188] sm:$0xff] %v316
                %v318 = vld [vmem:[%s216 + $0x640] sm:$0xff]
                %319 = vst [vmem:[%s217 + $0x190] sm:$0xff] %v318
                %v320 = vld [vmem:[%s216 + $0x648] sm:$0xff]
                %321 = vst [vmem:[%s217 + $0x198] sm:$0xff] %v320
                %v322 = vld [vmem:[%s216 + $0x680] sm:$0xff]
                %323 = vst [vmem:[%s217 + $0x1a0] sm:$0xff] %v322
                %v324 = vld [vmem:[%s216 + $0x688] sm:$0xff]
                %325 = vst [vmem:[%s217 + $0x1a8] sm:$0xff] %v324
                %v326 = vld [vmem:[%s216 + $0x6c0] sm:$0xff]
                %327 = vst [vmem:[%s217 + $0x1b0] sm:$0xff] %v326
                %v328 = vld [vmem:[%s216 + $0x6c8] sm:$0xff]
                %329 = vst [vmem:[%s217 + $0x1b8] sm:$0xff] %v328
                %v330 = vld [vmem:[%s216 + $0x700] sm:$0xff]
                %331 = vst [vmem:[%s217 + $0x1c0] sm:$0xff] %v330
                %v332 = vld [vmem:[%s216 + $0x708] sm:$0xff]
                %333 = vst [vmem:[%s217 + $0x1c8] sm:$0xff] %v332
                %v334 = vld [vmem:[%s216 + $0x740] sm:$0xff]
                %335 = vst [vmem:[%s217 + $0x1d0] sm:$0xff] %v334
                %v336 = vld [vmem:[%s216 + $0x748] sm:$0xff]
                %337 = vst [vmem:[%s217 + $0x1d8] sm:$0xff] %v336
                %v338 = vld [vmem:[%s216 + $0x780] sm:$0xff]
                %339 = vst [vmem:[%s217 + $0x1e0] sm:$0xff] %v338
                %v340 = vld [vmem:[%s216 + $0x788] sm:$0xff]
                %341 = vst [vmem:[%s217 + $0x1e8] sm:$0xff] %v340
                %v342 = vld [vmem:[%s216 + $0x7c0] sm:$0xff]
                %343 = vst [vmem:[%s217 + $0x1f0] sm:$0xff] %v342
                %v344 = vld [vmem:[%s216 + $0x7c8] sm:$0xff]
                %345 = vst [vmem:[%s217 + $0x1f8] sm:$0xff] %v344
                %v346 = vld [vmem:[%s216 + $0x800] sm:$0xff]
                %347 = vst [vmem:[%s217 + $0x200] sm:$0xff] %v346
                %v348 = vld [vmem:[%s216 + $0x808] sm:$0xff]
                %349 = vst [vmem:[%s217 + $0x208] sm:$0xff] %v348
                %v350 = vld [vmem:[%s216 + $0x840] sm:$0xff]
                %351 = vst [vmem:[%s217 + $0x210] sm:$0xff] %v350
                %v352 = vld [vmem:[%s216 + $0x848] sm:$0xff]
                %353 = vst [vmem:[%s217 + $0x218] sm:$0xff] %v352
                %v354 = vld [vmem:[%s216 + $0x880] sm:$0xff]
                %355 = vst [vmem:[%s217 + $0x220] sm:$0xff] %v354
                %v356 = vld [vmem:[%s216 + $0x888] sm:$0xff]
                %357 = vst [vmem:[%s217 + $0x228] sm:$0xff] %v356
                %v358 = vld [vmem:[%s216 + $0x8c0] sm:$0xff]
                %359 = vst [vmem:[%s217 + $0x230] sm:$0xff] %v358
                %v360 = vld [vmem:[%s216 + $0x8c8] sm:$0xff]
                %361 = vst [vmem:[%s217 + $0x238] sm:$0xff] %v360
                %v362 = vld [vmem:[%s216 + $0x900] sm:$0xff]
                %363 = vst [vmem:[%s217 + $0x240] sm:$0xff] %v362
                %v364 = vld [vmem:[%s216 + $0x908] sm:$0xff]
                %365 = vst [vmem:[%s217 + $0x248] sm:$0xff] %v364
                %v366 = vld [vmem:[%s216 + $0x940] sm:$0xff]
                %367 = vst [vmem:[%s217 + $0x250] sm:$0xff] %v366
                %v368 = vld [vmem:[%s216 + $0x948] sm:$0xff]
                %369 = vst [vmem:[%s217 + $0x258] sm:$0xff] %v368
                %v370 = vld [vmem:[%s216 + $0x980] sm:$0xff]
                %371 = vst [vmem:[%s217 + $0x260] sm:$0xff] %v370
                %v372 = vld [vmem:[%s216 + $0x988] sm:$0xff]
                %373 = vst [vmem:[%s217 + $0x268] sm:$0xff] %v372
                %v374 = vld [vmem:[%s216 + $0x9c0] sm:$0xff]
                %375 = vst [vmem:[%s217 + $0x270] sm:$0xff] %v374
                %v376 = vld [vmem:[%s216 + $0x9c8] sm:$0xff]
                %377 = vst [vmem:[%s217 + $0x278] sm:$0xff] %v376
                %v378 = vld [vmem:[%s216 + $0xa00] sm:$0xff]
                %379 = vst [vmem:[%s217 + $0x280] sm:$0xff] %v378
                %v380 = vld [vmem:[%s216 + $0xa08] sm:$0xff]
                %381 = vst [vmem:[%s217 + $0x288] sm:$0xff] %v380
                %v382 = vld [vmem:[%s216 + $0xa40] sm:$0xff]
                %383 = vst [vmem:[%s217 + $0x290] sm:$0xff] %v382
                %v384 = vld [vmem:[%s216 + $0xa48] sm:$0xff]
                %385 = vst [vmem:[%s217 + $0x298] sm:$0xff] %v384
                %v386 = vld [vmem:[%s216 + $0xa80] sm:$0xff]
                %387 = vst [vmem:[%s217 + $0x2a0] sm:$0xff] %v386
                %v388 = vld [vmem:[%s216 + $0xa88] sm:$0xff]
                %389 = vst [vmem:[%s217 + $0x2a8] sm:$0xff] %v388
                %v390 = vld [vmem:[%s216 + $0xac0] sm:$0xff]
                %391 = vst [vmem:[%s217 + $0x2b0] sm:$0xff] %v390
                %v392 = vld [vmem:[%s216 + $0xac8] sm:$0xff]
                %393 = vst [vmem:[%s217 + $0x2b8] sm:$0xff] %v392
                %v394 = vld [vmem:[%s216 + $0xb00] sm:$0xff]
                %395 = vst [vmem:[%s217 + $0x2c0] sm:$0xff] %v394
                %v396 = vld [vmem:[%s216 + $0xb08] sm:$0xff]
                %397 = vst [vmem:[%s217 + $0x2c8] sm:$0xff] %v396
                %v398 = vld [vmem:[%s216 + $0xb40] sm:$0xff]
                %399 = vst [vmem:[%s217 + $0x2d0] sm:$0xff] %v398
                %v400 = vld [vmem:[%s216 + $0xb48] sm:$0xff]
                %401 = vst [vmem:[%s217 + $0x2d8] sm:$0xff] %v400
                %v402 = vld [vmem:[%s216 + $0xb80] sm:$0xff]
                %403 = vst [vmem:[%s217 + $0x2e0] sm:$0xff] %v402
                %v404 = vld [vmem:[%s216 + $0xb88] sm:$0xff]
                %405 = vst [vmem:[%s217 + $0x2e8] sm:$0xff] %v404
                %v406 = vld [vmem:[%s216 + $0xbc0] sm:$0xff]
                %407 = vst [vmem:[%s217 + $0x2f0] sm:$0xff] %v406
                %v408 = vld [vmem:[%s216 + $0xbc8] sm:$0xff]
                %409 = vst [vmem:[%s217 + $0x2f8] sm:$0xff] %v408
                %v410 = vld [vmem:[%s216 + $0xc00] sm:$0xff]
                %411 = vst [vmem:[%s217 + $0x300] sm:$0xff] %v410
                %v412 = vld [vmem:[%s216 + $0xc08] sm:$0xff]
                %413 = vst [vmem:[%s217 + $0x308] sm:$0xff] %v412
                %v414 = vld [vmem:[%s216 + $0xc40] sm:$0xff]
                %415 = vst [vmem:[%s217 + $0x310] sm:$0xff] %v414
                %v416 = vld [vmem:[%s216 + $0xc48] sm:$0xff]
                %417 = vst [vmem:[%s217 + $0x318] sm:$0xff] %v416
                %v418 = vld [vmem:[%s216 + $0xc80] sm:$0xff]
                %419 = vst [vmem:[%s217 + $0x320] sm:$0xff] %v418
                %v420 = vld [vmem:[%s216 + $0xc88] sm:$0xff]
                %421 = vst [vmem:[%s217 + $0x328] sm:$0xff] %v420
                %v422 = vld [vmem:[%s216 + $0xcc0] sm:$0xff]
                %423 = vst [vmem:[%s217 + $0x330] sm:$0xff] %v422
                %v424 = vld [vmem:[%s216 + $0xcc8] sm:$0xff]
                %425 = vst [vmem:[%s217 + $0x338] sm:$0xff] %v424
                %v426 = vld [vmem:[%s216 + $0xd00] sm:$0xff]
                %427 = vst [vmem:[%s217 + $0x340] sm:$0xff] %v426
                %v428 = vld [vmem:[%s216 + $0xd08] sm:$0xff]
                %429 = vst [vmem:[%s217 + $0x348] sm:$0xff] %v428
                %v430 = vld [vmem:[%s216 + $0xd40] sm:$0xff]
                %431 = vst [vmem:[%s217 + $0x350] sm:$0xff] %v430
                %v432 = vld [vmem:[%s216 + $0xd48] sm:$0xff]
                %433 = vst [vmem:[%s217 + $0x358] sm:$0xff] %v432
                %v434 = vld [vmem:[%s216 + $0xd80] sm:$0xff]
                %435 = vst [vmem:[%s217 + $0x360] sm:$0xff] %v434
                %v436 = vld [vmem:[%s216 + $0xd88] sm:$0xff]
                %437 = vst [vmem:[%s217 + $0x368] sm:$0xff] %v436
                %v438 = vld [vmem:[%s216 + $0xdc0] sm:$0xff]
                %439 = vst [vmem:[%s217 + $0x370] sm:$0xff] %v438
                %v440 = vld [vmem:[%s216 + $0xdc8] sm:$0xff]
                %441 = vst [vmem:[%s217 + $0x378] sm:$0xff] %v440
                %v442 = vld [vmem:[%s216 + $0xe00] sm:$0xff]
                %443 = vst [vmem:[%s217 + $0x380] sm:$0xff] %v442
                %v444 = vld [vmem:[%s216 + $0xe08] sm:$0xff]
                %445 = vst [vmem:[%s217 + $0x388] sm:$0xff] %v444
                %v446 = vld [vmem:[%s216 + $0xe40] sm:$0xff]
                %447 = vst [vmem:[%s217 + $0x390] sm:$0xff] %v446
                %v448 = vld [vmem:[%s216 + $0xe48] sm:$0xff]
                %449 = vst [vmem:[%s217 + $0x398] sm:$0xff] %v448
                %v450 = vld [vmem:[%s216 + $0xe80] sm:$0xff]
                %451 = vst [vmem:[%s217 + $0x3a0] sm:$0xff] %v450
                %v452 = vld [vmem:[%s216 + $0xe88] sm:$0xff]
                %453 = vst [vmem:[%s217 + $0x3a8] sm:$0xff] %v452
                %v454 = vld [vmem:[%s216 + $0xec0] sm:$0xff]
                %455 = vst [vmem:[%s217 + $0x3b0] sm:$0xff] %v454
                %v456 = vld [vmem:[%s216 + $0xec8] sm:$0xff]
                %457 = vst [vmem:[%s217 + $0x3b8] sm:$0xff] %v456
                %v458 = vld [vmem:[%s216 + $0xf00] sm:$0xff]
                %459 = vst [vmem:[%s217 + $0x3c0] sm:$0xff] %v458
                %v460 = vld [vmem:[%s216 + $0xf08] sm:$0xff]
                %461 = vst [vmem:[%s217 + $0x3c8] sm:$0xff] %v460
                %v462 = vld [vmem:[%s216 + $0xf40] sm:$0xff]
                %463 = vst [vmem:[%s217 + $0x3d0] sm:$0xff] %v462
                %v464 = vld [vmem:[%s216 + $0xf48] sm:$0xff]
                %465 = vst [vmem:[%s217 + $0x3d8] sm:$0xff] %v464
                %v466 = vld [vmem:[%s216 + $0xf80] sm:$0xff]
                %467 = vst [vmem:[%s217 + $0x3e0] sm:$0xff] %v466
                %v468 = vld [vmem:[%s216 + $0xf88] sm:$0xff]
                %469 = vst [vmem:[%s217 + $0x3e8] sm:$0xff] %v468
                %v470 = vld [vmem:[%s216 + $0xfc0] sm:$0xff]
                %471 = vst [vmem:[%s217 + $0x3f0] sm:$0xff] %v470
                %v472 = vld [vmem:[%s216 + $0xfc8] sm:$0xff]
                %473 = vst [vmem:[%s217 + $0x3f8] sm:$0xff] %v472
              $region56: #{double_fc_pallas.1} parent=50 // loop_footer
                %s215 = sadd.s32 1, %s211
              $region57: #{double_fc_pallas.1} parent=50 // loop_footer_branch
                %210 = sbr.rel target = $region53
              $region58: #{double_fc_pallas.1} parent=50 // loop_exit
                _
            $region51: #{double_fc_pallas.1} parent=46 // pred_fallthru
              _
            // Predicated region
            $region59: #{double_fc_pallas.1} parent=46 // pred_check
              _
            $region60: #{double_fc_pallas.1} parent=46 // pred_check_branch
              %475 = sbr.rel target = $region62
            $region61: #{double_fc_pallas.1} parent=46 // pred_region
              _
            $region62: #{double_fc_pallas.1} parent=46 // pred_fallthru
              _
          $region47: #{double_fc_pallas.1} parent=42 // pred_fallthru
            _
          %476 = vnop
        $region43: #{double_fc_pallas.1} parent=15 // pred_fallthru
          _
        // Predicated region
        $region63: #{double_fc_pallas.1} parent=15 // pred_check
          %p477 = pneg %p104
        $region64: #{double_fc_pallas.1} parent=15 // pred_check_branch
          %479 = sbr.rel (%p477) target = $region66
        $region65: #{double_fc_pallas.1} parent=15 // pred_region
          %s480 = smul.u32 4, %s17
          %p481 = scmp.lt.s32.totalorder %s480, 15
          %s482 = scalar_select %p481, %s480, 15
          %s483 = scalar_lea.vmem %s2, %s482
          %s484 = smul.u32 4, %s17
        $region66: #{double_fc_pallas.1} parent=15 // pred_fallthru
          _
      $region16: #{double_fc_pallas.1} parent=5 // pred_fallthru
        _
      %p485 = scmp.le.s32.totalorder 1, %s9
      %p486 = scmp.lt.s32.totalorder %s9, 9
      %p487 = pnand %p485, %p486
      %p488 = pneg %p487
      // Predicated region
      $region67: #{double_fc_pallas.1} parent=5 // pred_check
        _
      $region68: #{double_fc_pallas.1} parent=5 // pred_check_branch
        %490 = sbr.rel (%p487) target = $region70
      $region69: #{double_fc_pallas.1} parent=5 // pred_region
        %s491 = ssub.s32 %s9, 1
        %s492 = sand.u32 %s43, 1
        %s493 = sand.u32 %s43, 1
        %s494 = smul.addr %s493, 32
        %s495 = scalar_lea.vmem [#allocation3], %s494
        // Predicated region
        $region71: #{double_fc_pallas.1} parent=69 // pred_check
          %p496 = pneg %p56
        $region72: #{double_fc_pallas.1} parent=69 // pred_check_branch
          %498 = sbr.rel (%p496) target = $region74
        $region73: #{double_fc_pallas.1} parent=69 // pred_region
          _
        $region74: #{double_fc_pallas.1} parent=69 // pred_fallthru
          _
        %s499 = sand.u32 %s71, 1
        %s500 = sand.u32 %s71, 1
        %s501 = smul.addr %s500, 1024
        %s502 = scalar_lea.vmem [#allocation4], %s501
        // Predicated region
        $region75: #{double_fc_pallas.1} parent=69 // pred_check
          %p503 = pneg %p84
        $region76: #{double_fc_pallas.1} parent=69 // pred_check_branch
          %505 = sbr.rel (%p503) target = $region78
        $region77: #{double_fc_pallas.1} parent=69 // pred_region
          _
        $region78: #{double_fc_pallas.1} parent=69 // pred_fallthru
          _
        %s506 = sand.u32 %s43, 1
        %s507 = sand.u32 %s43, 1
        %s508 = smul.addr %s507, 32
        %s509 = scalar_lea.vmem [#allocation3], %s508
        %p510 = pneg %p56
        %p511 = pneg %p53
        %s512 = sand.u32 %s71, 1
        %s513 = sand.u32 %s71, 1
        %s514 = smul.addr %s513, 1024
        %s515 = scalar_lea.vmem [#allocation4], %s514
        %p516 = pneg %p84
        %p517 = pneg %p81
        %s518 = smul.u32 4, %s20
        %p519 = scmp.lt.s32.totalorder %s518, 15
        %s520 = scalar_select %p519, %s518, 15
        %s521 = scalar_lea.vmem %s2, %s520
        %p522 = pneg %p110
        %p523 = pneg %p107
        %p524 = pneg %p138
        %p525 = pneg %p135
        %s526 = sand.u32 %s125, 1
        %s527 = sand.u32 %s125, 1
        %s528 = smul.addr %s527, 64
        %s529 = scalar_lea.vmem [#allocation5], %s528
        %s530 = smul.u32 2, %s19
        %s531 = smul.u32 4, %s21
        %s532 = smul.u32 64, %s21
        %s533 = smul.u32 4, %s20
        %s534 = smul.u32 4, %s20
        %p535 = scmp.lt.s32.totalorder %s534, 15
        %s536 = scalar_select %p535, %s534, 15
        %s537 = scalar_lea.vmem %s2, %s536
        %s538 = smul.u32 4, %s20
        %s539 = smul.u32 2, %s19
        %s540 = smul.u32 4, %s20
        %p541 = scmp.eq.s32.totalorder %s21, 0
        // Predicated region
        $region79: #{double_fc_pallas.1} parent=69 // pred_check
          %p542 = pneg %p541
        $region80: #{double_fc_pallas.1} parent=69 // pred_check_branch
          %544 = sbr.rel (%p542) target = $region82
        $region81: #{double_fc_pallas.1} parent=69 // pred_region
          %545 = vst [vmem:[#allocation2] sm:$0xff] 0.0
          %546 = vst [vmem:[#allocation2 + $0x8] sm:$0xff] 0.0
          %547 = vst [vmem:[#allocation2 + $0x10] sm:$0xff] 0.0
          %548 = vst [vmem:[#allocation2 + $0x18] sm:$0xff] 0.0
          %549 = vst [vmem:[#allocation2 + $0x20] sm:$0xff] 0.0
          %550 = vst [vmem:[#allocation2 + $0x28] sm:$0xff] 0.0
          %551 = vst [vmem:[#allocation2 + $0x30] sm:$0xff] 0.0
          %552 = vst [vmem:[#allocation2 + $0x38] sm:$0xff] 0.0
        $region82: #{double_fc_pallas.1} parent=69 // pred_fallthru
          _
        %v553 = vld [vmem:[#allocation2] sm:$0xff]
        %v554 = vld [vmem:[#allocation2 + $0x8] sm:$0xff]
        %v555 = vld [vmem:[#allocation2 + $0x10] sm:$0xff]
        %v556 = vld [vmem:[#allocation2 + $0x18] sm:$0xff]
        %v557 = vld [vmem:[#allocation2 + $0x20] sm:$0xff]
        %v558 = vld [vmem:[#allocation2 + $0x28] sm:$0xff]
        %v559 = vld [vmem:[#allocation2 + $0x30] sm:$0xff]
        %v560 = vld [vmem:[#allocation2 + $0x38] sm:$0xff]
        %v561 = vld [vmem:[%s495] sm:$0xff]
        %v562 = vld [vmem:[%s495 + $0x8] sm:$0xff]
        %v563 = vld [vmem:[%s495 + $0x10] sm:$0xff]
        %v564 = vld [vmem:[%s495 + $0x18] sm:$0xff]
        %v565 = vld [vmem:[%s502] sm:$0xff]
        %v566 = vld [vmem:[%s502 + $0x8] sm:$0xff]
        %v567 = vld [vmem:[%s502 + $0x10] sm:$0xff]
        %v568 = vld [vmem:[%s502 + $0x18] sm:$0xff]
        %v569 = vld [vmem:[%s502 + $0x20] sm:$0xff]
        %v570 = vld [vmem:[%s502 + $0x28] sm:$0xff]
        %v571 = vld [vmem:[%s502 + $0x30] sm:$0xff]
        %v572 = vld [vmem:[%s502 + $0x38] sm:$0xff]
        %v573 = vld [vmem:[%s502 + $0x40] sm:$0xff]
        %v574 = vld [vmem:[%s502 + $0x48] sm:$0xff]
        %v575 = vld [vmem:[%s502 + $0x50] sm:$0xff]
        %v576 = vld [vmem:[%s502 + $0x58] sm:$0xff]
        %v577 = vld [vmem:[%s502 + $0x60] sm:$0xff]
        %v578 = vld [vmem:[%s502 + $0x68] sm:$0xff]
        %v579 = vld [vmem:[%s502 + $0x70] sm:$0xff]
        %v580 = vld [vmem:[%s502 + $0x78] sm:$0xff]
        %v581 = vld [vmem:[%s502 + $0x80] sm:$0xff]
        %v582 = vld [vmem:[%s502 + $0x88] sm:$0xff]
        %v583 = vld [vmem:[%s502 + $0x90] sm:$0xff]
        %v584 = vld [vmem:[%s502 + $0x98] sm:$0xff]
        %v585 = vld [vmem:[%s502 + $0xa0] sm:$0xff]
        %v586 = vld [vmem:[%s502 + $0xa8] sm:$0xff]
        %v587 = vld [vmem:[%s502 + $0xb0] sm:$0xff]
        %v588 = vld [vmem:[%s502 + $0xb8] sm:$0xff]
        %v589 = vld [vmem:[%s502 + $0xc0] sm:$0xff]
        %v590 = vld [vmem:[%s502 + $0xc8] sm:$0xff]
        %v591 = vld [vmem:[%s502 + $0xd0] sm:$0xff]
        %v592 = vld [vmem:[%s502 + $0xd8] sm:$0xff]
        %v593 = vld [vmem:[%s502 + $0xe0] sm:$0xff]
        %v594 = vld [vmem:[%s502 + $0xe8] sm:$0xff]
        %v595 = vld [vmem:[%s502 + $0xf0] sm:$0xff]
        %v596 = vld [vmem:[%s502 + $0xf8] sm:$0xff]
        %v597 = vld [vmem:[%s502 + $0x100] sm:$0xff]
        %v598 = vld [vmem:[%s502 + $0x108] sm:$0xff]
        %v599 = vld [vmem:[%s502 + $0x110] sm:$0xff]
        %v600 = vld [vmem:[%s502 + $0x118] sm:$0xff]
        %v601 = vld [vmem:[%s502 + $0x120] sm:$0xff]
        %v602 = vld [vmem:[%s502 + $0x128] sm:$0xff]
        %v603 = vld [vmem:[%s502 + $0x130] sm:$0xff]
        %v604 = vld [vmem:[%s502 + $0x138] sm:$0xff]
        %v605 = vld [vmem:[%s502 + $0x140] sm:$0xff]
        %v606 = vld [vmem:[%s502 + $0x148] sm:$0xff]
        %v607 = vld [vmem:[%s502 + $0x150] sm:$0xff]
        %v608 = vld [vmem:[%s502 + $0x158] sm:$0xff]
        %v609 = vld [vmem:[%s502 + $0x160] sm:$0xff]
        %v610 = vld [vmem:[%s502 + $0x168] sm:$0xff]
        %v611 = vld [vmem:[%s502 + $0x170] sm:$0xff]
        %v612 = vld [vmem:[%s502 + $0x178] sm:$0xff]
        %v613 = vld [vmem:[%s502 + $0x180] sm:$0xff]
        %v614 = vld [vmem:[%s502 + $0x188] sm:$0xff]
        %v615 = vld [vmem:[%s502 + $0x190] sm:$0xff]
        %v616 = vld [vmem:[%s502 + $0x198] sm:$0xff]
        %v617 = vld [vmem:[%s502 + $0x1a0] sm:$0xff]
        %v618 = vld [vmem:[%s502 + $0x1a8] sm:$0xff]
        %v619 = vld [vmem:[%s502 + $0x1b0] sm:$0xff]
        %v620 = vld [vmem:[%s502 + $0x1b8] sm:$0xff]
        %v621 = vld [vmem:[%s502 + $0x1c0] sm:$0xff]
        %v622 = vld [vmem:[%s502 + $0x1c8] sm:$0xff]
        %v623 = vld [vmem:[%s502 + $0x1d0] sm:$0xff]
        %v624 = vld [vmem:[%s502 + $0x1d8] sm:$0xff]
        %v625 = vld [vmem:[%s502 + $0x1e0] sm:$0xff]
        %v626 = vld [vmem:[%s502 + $0x1e8] sm:$0xff]
        %v627 = vld [vmem:[%s502 + $0x1f0] sm:$0xff]
        %v628 = vld [vmem:[%s502 + $0x1f8] sm:$0xff]
        %v629 = vld [vmem:[%s502 + $0x200] sm:$0xff]
        %v630 = vld [vmem:[%s502 + $0x208] sm:$0xff]
        %v631 = vld [vmem:[%s502 + $0x210] sm:$0xff]
        %v632 = vld [vmem:[%s502 + $0x218] sm:$0xff]
        %v633 = vld [vmem:[%s502 + $0x220] sm:$0xff]
        %v634 = vld [vmem:[%s502 + $0x228] sm:$0xff]
        %v635 = vld [vmem:[%s502 + $0x230] sm:$0xff]
        %v636 = vld [vmem:[%s502 + $0x238] sm:$0xff]
        %v637 = vld [vmem:[%s502 + $0x240] sm:$0xff]
        %v638 = vld [vmem:[%s502 + $0x248] sm:$0xff]
        %v639 = vld [vmem:[%s502 + $0x250] sm:$0xff]
        %v640 = vld [vmem:[%s502 + $0x258] sm:$0xff]
        %v641 = vld [vmem:[%s502 + $0x260] sm:$0xff]
        %v642 = vld [vmem:[%s502 + $0x268] sm:$0xff]
        %v643 = vld [vmem:[%s502 + $0x270] sm:$0xff]
        %v644 = vld [vmem:[%s502 + $0x278] sm:$0xff]
        %v645 = vld [vmem:[%s502 + $0x280] sm:$0xff]
        %v646 = vld [vmem:[%s502 + $0x288] sm:$0xff]
        %v647 = vld [vmem:[%s502 + $0x290] sm:$0xff]
        %v648 = vld [vmem:[%s502 + $0x298] sm:$0xff]
        %v649 = vld [vmem:[%s502 + $0x2a0] sm:$0xff]
        %v650 = vld [vmem:[%s502 + $0x2a8] sm:$0xff]
        %v651 = vld [vmem:[%s502 + $0x2b0] sm:$0xff]
        %v652 = vld [vmem:[%s502 + $0x2b8] sm:$0xff]
        %v653 = vld [vmem:[%s502 + $0x2c0] sm:$0xff]
        %v654 = vld [vmem:[%s502 + $0x2c8] sm:$0xff]
        %v655 = vld [vmem:[%s502 + $0x2d0] sm:$0xff]
        %v656 = vld [vmem:[%s502 + $0x2d8] sm:$0xff]
        %v657 = vld [vmem:[%s502 + $0x2e0] sm:$0xff]
        %v658 = vld [vmem:[%s502 + $0x2e8] sm:$0xff]
        %v659 = vld [vmem:[%s502 + $0x2f0] sm:$0xff]
        %v660 = vld [vmem:[%s502 + $0x2f8] sm:$0xff]
        %v661 = vld [vmem:[%s502 + $0x300] sm:$0xff]
        %v662 = vld [vmem:[%s502 + $0x308] sm:$0xff]
        %v663 = vld [vmem:[%s502 + $0x310] sm:$0xff]
        %v664 = vld [vmem:[%s502 + $0x318] sm:$0xff]
        %v665 = vld [vmem:[%s502 + $0x320] sm:$0xff]
        %v666 = vld [vmem:[%s502 + $0x328] sm:$0xff]
        %v667 = vld [vmem:[%s502 + $0x330] sm:$0xff]
        %v668 = vld [vmem:[%s502 + $0x338] sm:$0xff]
        %v669 = vld [vmem:[%s502 + $0x340] sm:$0xff]
        %v670 = vld [vmem:[%s502 + $0x348] sm:$0xff]
        %v671 = vld [vmem:[%s502 + $0x350] sm:$0xff]
        %v672 = vld [vmem:[%s502 + $0x358] sm:$0xff]
        %v673 = vld [vmem:[%s502 + $0x360] sm:$0xff]
        %v674 = vld [vmem:[%s502 + $0x368] sm:$0xff]
        %v675 = vld [vmem:[%s502 + $0x370] sm:$0xff]
        %v676 = vld [vmem:[%s502 + $0x378] sm:$0xff]
        %v677 = vld [vmem:[%s502 + $0x380] sm:$0xff]
        %v678 = vld [vmem:[%s502 + $0x388] sm:$0xff]
        %v679 = vld [vmem:[%s502 + $0x390] sm:$0xff]
        %v680 = vld [vmem:[%s502 + $0x398] sm:$0xff]
        %v681 = vld [vmem:[%s502 + $0x3a0] sm:$0xff]
        %v682 = vld [vmem:[%s502 + $0x3a8] sm:$0xff]
        %v683 = vld [vmem:[%s502 + $0x3b0] sm:$0xff]
        %v684 = vld [vmem:[%s502 + $0x3b8] sm:$0xff]
        %v685 = vld [vmem:[%s502 + $0x3c0] sm:$0xff]
        %v686 = vld [vmem:[%s502 + $0x3c8] sm:$0xff]
        %v687 = vld [vmem:[%s502 + $0x3d0] sm:$0xff]
        %v688 = vld [vmem:[%s502 + $0x3d8] sm:$0xff]
        %v689 = vld [vmem:[%s502 + $0x3e0] sm:$0xff]
        %v690 = vld [vmem:[%s502 + $0x3e8] sm:$0xff]
        %v691 = vld [vmem:[%s502 + $0x3f0] sm:$0xff]
        %v692 = vld [vmem:[%s502 + $0x3f8] sm:$0xff]
        %v697 = vunpack.c.l.b16 %v561
        %v698 = vunpack.c.h.b16 %v561
        %v699 = vunpack.c.l.b16 %v562
        %v700 = vunpack.c.h.b16 %v562
        %v701 = vunpack.c.l.b16 %v563
        %v702 = vunpack.c.h.b16 %v563
        %v703 = vunpack.c.l.b16 %v564
        %v704 = vunpack.c.h.b16 %v564
        %v705 = vpack.c.b16 %v701, %v697
        %v706 = vpack.c.b16 %v702, %v698
        %v707 = vpack.c.b16 %v703, %v699
        %v708 = vpack.c.b16 %v704, %v700
        %v841 = vunpack.c.l.b16 %v565
        %v842 = vunpack.c.h.b16 %v565
        %v843 = vunpack.c.l.b16 %v566
        %v844 = vunpack.c.h.b16 %v566
        %v845 = vunpack.c.l.b16 %v567
        %v846 = vunpack.c.h.b16 %v567
        %v847 = vunpack.c.l.b16 %v568
        %v848 = vunpack.c.h.b16 %v568
        %v849 = vunpack.c.l.b16 %v569
        %v850 = vunpack.c.h.b16 %v569
        %v851 = vunpack.c.l.b16 %v570
        %v852 = vunpack.c.h.b16 %v570
        %v853 = vunpack.c.l.b16 %v571
        %v854 = vunpack.c.h.b16 %v571
        %v855 = vunpack.c.l.b16 %v572
        %v856 = vunpack.c.h.b16 %v572
        %v857 = vunpack.c.l.b16 %v573
        %v858 = vunpack.c.h.b16 %v573
        %v859 = vunpack.c.l.b16 %v574
        %v860 = vunpack.c.h.b16 %v574
        %v861 = vunpack.c.l.b16 %v575
        %v862 = vunpack.c.h.b16 %v575
        %v863 = vunpack.c.l.b16 %v576
        %v864 = vunpack.c.h.b16 %v576
        %v865 = vunpack.c.l.b16 %v577
        %v866 = vunpack.c.h.b16 %v577
        %v867 = vunpack.c.l.b16 %v578
        %v868 = vunpack.c.h.b16 %v578
        %v869 = vunpack.c.l.b16 %v579
        %v870 = vunpack.c.h.b16 %v579
        %v871 = vunpack.c.l.b16 %v580
        %v872 = vunpack.c.h.b16 %v580
        %v873 = vunpack.c.l.b16 %v581
        %v874 = vunpack.c.h.b16 %v581
        %v875 = vunpack.c.l.b16 %v582
        %v876 = vunpack.c.h.b16 %v582
        %v877 = vunpack.c.l.b16 %v583
        %v878 = vunpack.c.h.b16 %v583
        %v879 = vunpack.c.l.b16 %v584
        %v880 = vunpack.c.h.b16 %v584
        %v881 = vunpack.c.l.b16 %v585
        %v882 = vunpack.c.h.b16 %v585
        %v883 = vunpack.c.l.b16 %v586
        %v884 = vunpack.c.h.b16 %v586
        %v885 = vunpack.c.l.b16 %v587
        %v886 = vunpack.c.h.b16 %v587
        %v887 = vunpack.c.l.b16 %v588
        %v888 = vunpack.c.h.b16 %v588
        %v889 = vunpack.c.l.b16 %v589
        %v890 = vunpack.c.h.b16 %v589
        %v891 = vunpack.c.l.b16 %v590
        %v892 = vunpack.c.h.b16 %v590
        %v893 = vunpack.c.l.b16 %v591
        %v894 = vunpack.c.h.b16 %v591
        %v895 = vunpack.c.l.b16 %v592
        %v896 = vunpack.c.h.b16 %v592
        %v897 = vunpack.c.l.b16 %v593
        %v898 = vunpack.c.h.b16 %v593
        %v899 = vunpack.c.l.b16 %v594
        %v900 = vunpack.c.h.b16 %v594
        %v901 = vunpack.c.l.b16 %v595
        %v902 = vunpack.c.h.b16 %v595
        %v903 = vunpack.c.l.b16 %v596
        %v904 = vunpack.c.h.b16 %v596
        %v905 = vunpack.c.l.b16 %v597
        %v906 = vunpack.c.h.b16 %v597
        %v907 = vunpack.c.l.b16 %v598
        %v908 = vunpack.c.h.b16 %v598
        %v909 = vunpack.c.l.b16 %v599
        %v910 = vunpack.c.h.b16 %v599
        %v911 = vunpack.c.l.b16 %v600
        %v912 = vunpack.c.h.b16 %v600
        %v913 = vunpack.c.l.b16 %v601
        %v914 = vunpack.c.h.b16 %v601
        %v915 = vunpack.c.l.b16 %v602
        %v916 = vunpack.c.h.b16 %v602
        %v917 = vunpack.c.l.b16 %v603
        %v918 = vunpack.c.h.b16 %v603
        %v919 = vunpack.c.l.b16 %v604
        %v920 = vunpack.c.h.b16 %v604
        %v921 = vunpack.c.l.b16 %v605
        %v922 = vunpack.c.h.b16 %v605
        %v923 = vunpack.c.l.b16 %v606
        %v924 = vunpack.c.h.b16 %v606
        %v925 = vunpack.c.l.b16 %v607
        %v926 = vunpack.c.h.b16 %v607
        %v927 = vunpack.c.l.b16 %v608
        %v928 = vunpack.c.h.b16 %v608
        %v929 = vunpack.c.l.b16 %v609
        %v930 = vunpack.c.h.b16 %v609
        %v931 = vunpack.c.l.b16 %v610
        %v932 = vunpack.c.h.b16 %v610
        %v933 = vunpack.c.l.b16 %v611
        %v934 = vunpack.c.h.b16 %v611
        %v935 = vunpack.c.l.b16 %v612
        %v936 = vunpack.c.h.b16 %v612
        %v937 = vunpack.c.l.b16 %v613
        %v938 = vunpack.c.h.b16 %v613
        %v939 = vunpack.c.l.b16 %v614
        %v940 = vunpack.c.h.b16 %v614
        %v941 = vunpack.c.l.b16 %v615
        %v942 = vunpack.c.h.b16 %v615
        %v943 = vunpack.c.l.b16 %v616
        %v944 = vunpack.c.h.b16 %v616
        %v945 = vunpack.c.l.b16 %v617
        %v946 = vunpack.c.h.b16 %v617
        %v947 = vunpack.c.l.b16 %v618
        %v948 = vunpack.c.h.b16 %v618
        %v949 = vunpack.c.l.b16 %v619
        %v950 = vunpack.c.h.b16 %v619
        %v951 = vunpack.c.l.b16 %v620
        %v952 = vunpack.c.h.b16 %v620
        %v953 = vunpack.c.l.b16 %v621
        %v954 = vunpack.c.h.b16 %v621
        %v955 = vunpack.c.l.b16 %v622
        %v956 = vunpack.c.h.b16 %v622
        %v957 = vunpack.c.l.b16 %v623
        %v958 = vunpack.c.h.b16 %v623
        %v959 = vunpack.c.l.b16 %v624
        %v960 = vunpack.c.h.b16 %v624
        %v961 = vunpack.c.l.b16 %v625
        %v962 = vunpack.c.h.b16 %v625
        %v963 = vunpack.c.l.b16 %v626
        %v964 = vunpack.c.h.b16 %v626
        %v965 = vunpack.c.l.b16 %v627
        %v966 = vunpack.c.h.b16 %v627
        %v967 = vunpack.c.l.b16 %v628
        %v968 = vunpack.c.h.b16 %v628
        %v969 = vunpack.c.l.b16 %v629
        %v970 = vunpack.c.h.b16 %v629
        %v971 = vunpack.c.l.b16 %v630
        %v972 = vunpack.c.h.b16 %v630
        %v973 = vunpack.c.l.b16 %v631
        %v974 = vunpack.c.h.b16 %v631
        %v975 = vunpack.c.l.b16 %v632
        %v976 = vunpack.c.h.b16 %v632
        %v977 = vunpack.c.l.b16 %v633
        %v978 = vunpack.c.h.b16 %v633
        %v979 = vunpack.c.l.b16 %v634
        %v980 = vunpack.c.h.b16 %v634
        %v981 = vunpack.c.l.b16 %v635
        %v982 = vunpack.c.h.b16 %v635
        %v983 = vunpack.c.l.b16 %v636
        %v984 = vunpack.c.h.b16 %v636
        %v985 = vunpack.c.l.b16 %v637
        %v986 = vunpack.c.h.b16 %v637
        %v987 = vunpack.c.l.b16 %v638
        %v988 = vunpack.c.h.b16 %v638
        %v989 = vunpack.c.l.b16 %v639
        %v990 = vunpack.c.h.b16 %v639
        %v991 = vunpack.c.l.b16 %v640
        %v992 = vunpack.c.h.b16 %v640
        %v993 = vunpack.c.l.b16 %v641
        %v994 = vunpack.c.h.b16 %v641
        %v995 = vunpack.c.l.b16 %v642
        %v996 = vunpack.c.h.b16 %v642
        %v997 = vunpack.c.l.b16 %v643
        %v998 = vunpack.c.h.b16 %v643
        %v999 = vunpack.c.l.b16 %v644
        %v1000 = vunpack.c.h.b16 %v644
        %v1001 = vunpack.c.l.b16 %v645
        %v1002 = vunpack.c.h.b16 %v645
        %v1003 = vunpack.c.l.b16 %v646
        %v1004 = vunpack.c.h.b16 %v646
        %v1005 = vunpack.c.l.b16 %v647
        %v1006 = vunpack.c.h.b16 %v647
        %v1007 = vunpack.c.l.b16 %v648
        %v1008 = vunpack.c.h.b16 %v648
        %v1009 = vunpack.c.l.b16 %v649
        %v1010 = vunpack.c.h.b16 %v649
        %v1011 = vunpack.c.l.b16 %v650
        %v1012 = vunpack.c.h.b16 %v650
        %v1013 = vunpack.c.l.b16 %v651
        %v1014 = vunpack.c.h.b16 %v651
        %v1015 = vunpack.c.l.b16 %v652
        %v1016 = vunpack.c.h.b16 %v652
        %v1017 = vunpack.c.l.b16 %v653
        %v1018 = vunpack.c.h.b16 %v653
        %v1019 = vunpack.c.l.b16 %v654
        %v1020 = vunpack.c.h.b16 %v654
        %v1021 = vunpack.c.l.b16 %v655
        %v1022 = vunpack.c.h.b16 %v655
        %v1023 = vunpack.c.l.b16 %v656
        %v1024 = vunpack.c.h.b16 %v656
        %v1025 = vunpack.c.l.b16 %v657
        %v1026 = vunpack.c.h.b16 %v657
        %v1027 = vunpack.c.l.b16 %v658
        %v1028 = vunpack.c.h.b16 %v658
        %v1029 = vunpack.c.l.b16 %v659
        %v1030 = vunpack.c.h.b16 %v659
        %v1031 = vunpack.c.l.b16 %v660
        %v1032 = vunpack.c.h.b16 %v660
        %v1033 = vunpack.c.l.b16 %v661
        %v1034 = vunpack.c.h.b16 %v661
        %v1035 = vunpack.c.l.b16 %v662
        %v1036 = vunpack.c.h.b16 %v662
        %v1037 = vunpack.c.l.b16 %v663
        %v1038 = vunpack.c.h.b16 %v663
        %v1039 = vunpack.c.l.b16 %v664
        %v1040 = vunpack.c.h.b16 %v664
        %v1041 = vunpack.c.l.b16 %v665
        %v1042 = vunpack.c.h.b16 %v665
        %v1043 = vunpack.c.l.b16 %v666
        %v1044 = vunpack.c.h.b16 %v666
        %v1045 = vunpack.c.l.b16 %v667
        %v1046 = vunpack.c.h.b16 %v667
        %v1047 = vunpack.c.l.b16 %v668
        %v1048 = vunpack.c.h.b16 %v668
        %v1049 = vunpack.c.l.b16 %v669
        %v1050 = vunpack.c.h.b16 %v669
        %v1051 = vunpack.c.l.b16 %v670
        %v1052 = vunpack.c.h.b16 %v670
        %v1053 = vunpack.c.l.b16 %v671
        %v1054 = vunpack.c.h.b16 %v671
        %v1055 = vunpack.c.l.b16 %v672
        %v1056 = vunpack.c.h.b16 %v672
        %v1057 = vunpack.c.l.b16 %v673
        %v1058 = vunpack.c.h.b16 %v673
        %v1059 = vunpack.c.l.b16 %v674
        %v1060 = vunpack.c.h.b16 %v674
        %v1061 = vunpack.c.l.b16 %v675
        %v1062 = vunpack.c.h.b16 %v675
        %v1063 = vunpack.c.l.b16 %v676
        %v1064 = vunpack.c.h.b16 %v676
        %v1065 = vunpack.c.l.b16 %v677
        %v1066 = vunpack.c.h.b16 %v677
        %v1067 = vunpack.c.l.b16 %v678
        %v1068 = vunpack.c.h.b16 %v678
        %v1069 = vunpack.c.l.b16 %v679
        %v1070 = vunpack.c.h.b16 %v679
        %v1071 = vunpack.c.l.b16 %v680
        %v1072 = vunpack.c.h.b16 %v680
        %v1073 = vunpack.c.l.b16 %v681
        %v1074 = vunpack.c.h.b16 %v681
        %v1075 = vunpack.c.l.b16 %v682
        %v1076 = vunpack.c.h.b16 %v682
        %v1077 = vunpack.c.l.b16 %v683
        %v1078 = vunpack.c.h.b16 %v683
        %v1079 = vunpack.c.l.b16 %v684
        %v1080 = vunpack.c.h.b16 %v684
        %v1081 = vunpack.c.l.b16 %v685
        %v1082 = vunpack.c.h.b16 %v685
        %v1083 = vunpack.c.l.b16 %v686
        %v1084 = vunpack.c.h.b16 %v686
        %v1085 = vunpack.c.l.b16 %v687
        %v1086 = vunpack.c.h.b16 %v687
        %v1087 = vunpack.c.l.b16 %v688
        %v1088 = vunpack.c.h.b16 %v688
        %v1089 = vunpack.c.l.b16 %v689
        %v1090 = vunpack.c.h.b16 %v689
        %v1091 = vunpack.c.l.b16 %v690
        %v1092 = vunpack.c.h.b16 %v690
        %v1093 = vunpack.c.l.b16 %v691
        %v1094 = vunpack.c.h.b16 %v691
        %v1095 = vunpack.c.l.b16 %v692
        %v1096 = vunpack.c.h.b16 %v692
        %v1097 = vpack.c.b16 %v845, %v841
        %v1098 = vpack.c.b16 %v846, %v842
        %v1099 = vpack.c.b16 %v847, %v843
        %v1100 = vpack.c.b16 %v848, %v844
        %v1101 = vpack.c.b16 %v853, %v849
        %v1102 = vpack.c.b16 %v854, %v850
        %v1103 = vpack.c.b16 %v855, %v851
        %v1104 = vpack.c.b16 %v856, %v852
        %v1105 = vpack.c.b16 %v861, %v857
        %v1106 = vpack.c.b16 %v862, %v858
        %v1107 = vpack.c.b16 %v863, %v859
        %v1108 = vpack.c.b16 %v864, %v860
        %v1109 = vpack.c.b16 %v869, %v865
        %v1110 = vpack.c.b16 %v870, %v866
        %v1111 = vpack.c.b16 %v871, %v867
        %v1112 = vpack.c.b16 %v872, %v868
        %v1113 = vpack.c.b16 %v877, %v873
        %v1114 = vpack.c.b16 %v878, %v874
        %v1115 = vpack.c.b16 %v879, %v875
        %v1116 = vpack.c.b16 %v880, %v876
        %v1117 = vpack.c.b16 %v885, %v881
        %v1118 = vpack.c.b16 %v886, %v882
        %v1119 = vpack.c.b16 %v887, %v883
        %v1120 = vpack.c.b16 %v888, %v884
        %v1121 = vpack.c.b16 %v893, %v889
        %v1122 = vpack.c.b16 %v894, %v890
        %v1123 = vpack.c.b16 %v895, %v891
        %v1124 = vpack.c.b16 %v896, %v892
        %v1125 = vpack.c.b16 %v901, %v897
        %v1126 = vpack.c.b16 %v902, %v898
        %v1127 = vpack.c.b16 %v903, %v899
        %v1128 = vpack.c.b16 %v904, %v900
        %v1129 = vpack.c.b16 %v909, %v905
        %v1130 = vpack.c.b16 %v910, %v906
        %v1131 = vpack.c.b16 %v911, %v907
        %v1132 = vpack.c.b16 %v912, %v908
        %v1133 = vpack.c.b16 %v917, %v913
        %v1134 = vpack.c.b16 %v918, %v914
        %v1135 = vpack.c.b16 %v919, %v915
        %v1136 = vpack.c.b16 %v920, %v916
        %v1137 = vpack.c.b16 %v925, %v921
        %v1138 = vpack.c.b16 %v926, %v922
        %v1139 = vpack.c.b16 %v927, %v923
        %v1140 = vpack.c.b16 %v928, %v924
        %v1141 = vpack.c.b16 %v933, %v929
        %v1142 = vpack.c.b16 %v934, %v930
        %v1143 = vpack.c.b16 %v935, %v931
        %v1144 = vpack.c.b16 %v936, %v932
        %v1145 = vpack.c.b16 %v941, %v937
        %v1146 = vpack.c.b16 %v942, %v938
        %v1147 = vpack.c.b16 %v943, %v939
        %v1148 = vpack.c.b16 %v944, %v940
        %v1149 = vpack.c.b16 %v949, %v945
        %v1150 = vpack.c.b16 %v950, %v946
        %v1151 = vpack.c.b16 %v951, %v947
        %v1152 = vpack.c.b16 %v952, %v948
        %v1153 = vpack.c.b16 %v957, %v953
        %v1154 = vpack.c.b16 %v958, %v954
        %v1155 = vpack.c.b16 %v959, %v955
        %v1156 = vpack.c.b16 %v960, %v956
        %v1157 = vpack.c.b16 %v965, %v961
        %v1158 = vpack.c.b16 %v966, %v962
        %v1159 = vpack.c.b16 %v967, %v963
        %v1160 = vpack.c.b16 %v968, %v964
        %v1161 = vpack.c.b16 %v973, %v969
        %v1162 = vpack.c.b16 %v974, %v970
        %v1163 = vpack.c.b16 %v975, %v971
        %v1164 = vpack.c.b16 %v976, %v972
        %v1165 = vpack.c.b16 %v981, %v977
        %v1166 = vpack.c.b16 %v982, %v978
        %v1167 = vpack.c.b16 %v983, %v979
        %v1168 = vpack.c.b16 %v984, %v980
        %v1169 = vpack.c.b16 %v989, %v985
        %v1170 = vpack.c.b16 %v990, %v986
        %v1171 = vpack.c.b16 %v991, %v987
        %v1172 = vpack.c.b16 %v992, %v988
        %v1173 = vpack.c.b16 %v997, %v993
        %v1174 = vpack.c.b16 %v998, %v994
        %v1175 = vpack.c.b16 %v999, %v995
        %v1176 = vpack.c.b16 %v1000, %v996
        %v1177 = vpack.c.b16 %v1005, %v1001
        %v1178 = vpack.c.b16 %v1006, %v1002
        %v1179 = vpack.c.b16 %v1007, %v1003
        %v1180 = vpack.c.b16 %v1008, %v1004
        %v1181 = vpack.c.b16 %v1013, %v1009
        %v1182 = vpack.c.b16 %v1014, %v1010
        %v1183 = vpack.c.b16 %v1015, %v1011
        %v1184 = vpack.c.b16 %v1016, %v1012
        %v1185 = vpack.c.b16 %v1021, %v1017
        %v1186 = vpack.c.b16 %v1022, %v1018
        %v1187 = vpack.c.b16 %v1023, %v1019
        %v1188 = vpack.c.b16 %v1024, %v1020
        %v1189 = vpack.c.b16 %v1029, %v1025
        %v1190 = vpack.c.b16 %v1030, %v1026
        %v1191 = vpack.c.b16 %v1031, %v1027
        %v1192 = vpack.c.b16 %v1032, %v1028
        %v1193 = vpack.c.b16 %v1037, %v1033
        %v1194 = vpack.c.b16 %v1038, %v1034
        %v1195 = vpack.c.b16 %v1039, %v1035
        %v1196 = vpack.c.b16 %v1040, %v1036
        %v1197 = vpack.c.b16 %v1045, %v1041
        %v1198 = vpack.c.b16 %v1046, %v1042
        %v1199 = vpack.c.b16 %v1047, %v1043
        %v1200 = vpack.c.b16 %v1048, %v1044
        %v1201 = vpack.c.b16 %v1053, %v1049
        %v1202 = vpack.c.b16 %v1054, %v1050
        %v1203 = vpack.c.b16 %v1055, %v1051
        %v1204 = vpack.c.b16 %v1056, %v1052
        %v1205 = vpack.c.b16 %v1061, %v1057
        %v1206 = vpack.c.b16 %v1062, %v1058
        %v1207 = vpack.c.b16 %v1063, %v1059
        %v1208 = vpack.c.b16 %v1064, %v1060
        %v1209 = vpack.c.b16 %v1069, %v1065
        %v1210 = vpack.c.b16 %v1070, %v1066
        %v1211 = vpack.c.b16 %v1071, %v1067
        %v1212 = vpack.c.b16 %v1072, %v1068
        %v1213 = vpack.c.b16 %v1077, %v1073
        %v1214 = vpack.c.b16 %v1078, %v1074
        %v1215 = vpack.c.b16 %v1079, %v1075
        %v1216 = vpack.c.b16 %v1080, %v1076
        %v1217 = vpack.c.b16 %v1085, %v1081
        %v1218 = vpack.c.b16 %v1086, %v1082
        %v1219 = vpack.c.b16 %v1087, %v1083
        %v1220 = vpack.c.b16 %v1088, %v1084
        %v1221 = vpack.c.b16 %v1093, %v1089
        %v1222 = vpack.c.b16 %v1094, %v1090
        %v1223 = vpack.c.b16 %v1095, %v1091
        %v1224 = vpack.c.b16 %v1096, %v1092
        %1353 = vmatprep.subr.bf16.mxu0 %v1098
        %1354 = vmatpush1.bf16.msra.mxu0 %v1097
        %1355 = vmatprep.subr.bf16.mxu0 %v1102
        %1356 = vmatpush1.bf16.msra.mxu0 %v1101
        %1357 = vmatprep.subr.bf16.mxu0 %v1106
        %1358 = vmatpush1.bf16.msra.mxu0 %v1105
        %1359 = vmatprep.subr.bf16.mxu0 %v1110
        %1360 = vmatpush1.bf16.msra.mxu0 %v1109
        %1361 = vmatprep.subr.bf16.mxu0 %v1114
        %1362 = vmatpush1.bf16.msra.mxu0 %v1113
        %1363 = vmatprep.subr.bf16.mxu0 %v1118
        %1364 = vmatpush1.bf16.msra.mxu0 %v1117
        %1365 = vmatprep.subr.bf16.mxu0 %v1122
        %1366 = vmatpush1.bf16.msra.mxu0 %v1121
        %1367 = vmatprep.subr.bf16.mxu0 %v1126
        %1368 = vmatpush1.bf16.msra.mxu0 %v1125
        %1369 = vmatprep.subr.bf16.mxu0 %v1130
        %1370 = vmatpush1.bf16.msra.mxu0 %v1129
        %1371 = vmatprep.subr.bf16.mxu0 %v1134
        %1372 = vmatpush1.bf16.msra.mxu0 %v1133
        %1373 = vmatprep.subr.bf16.mxu0 %v1138
        %1374 = vmatpush1.bf16.msra.mxu0 %v1137
        %1375 = vmatprep.subr.bf16.mxu0 %v1142
        %1376 = vmatpush1.bf16.msra.mxu0 %v1141
        %1377 = vmatprep.subr.bf16.mxu0 %v1146
        %1378 = vmatpush1.bf16.msra.mxu0 %v1145
        %1379 = vmatprep.subr.bf16.mxu0 %v1150
        %1380 = vmatpush1.bf16.msra.mxu0 %v1149
        %1381 = vmatprep.subr.bf16.mxu0 %v1154
        %1382 = vmatpush1.bf16.msra.mxu0 %v1153
        %1383 = vmatprep.subr.bf16.mxu0 %v1158
        %1384 = vmatpush1.bf16.msra.mxu0 %v1157
        %1385 = vmatprep.mubr.bf16.mxu0 %v706
        %1386 = vmatmul.mubr.bf16.gmra.mrb[0].mxu0 %v705
        %v1387 = vpop.f32.mrb[0].mxu0
        %v1388 = vadd.f32 0.0, %v1387
        %v1389 = vpop.f32.mrb[0].mxu0
        %v1390 = vadd.f32 0.0, %v1389
        %v1391 = vpop.f32.mrb[0].mxu0
        %v1392 = vadd.f32 0.0, %v1391
        %v1393 = vpop.f32.mrb[0].mxu0
        %v1394 = vadd.f32 0.0, %v1393
        %1395 = vdwg.mxu0
        %1396 = vmatprep.subr.bf16.mxu0 %v1162
        %1397 = vmatpush1.bf16.msra.mxu0 %v1161
        %1398 = vmatprep.subr.bf16.mxu0 %v1166
        %1399 = vmatpush1.bf16.msra.mxu0 %v1165
        %1400 = vmatprep.subr.bf16.mxu0 %v1170
        %1401 = vmatpush1.bf16.msra.mxu0 %v1169
        %1402 = vmatprep.subr.bf16.mxu0 %v1174
        %1403 = vmatpush1.bf16.msra.mxu0 %v1173
        %1404 = vmatprep.subr.bf16.mxu0 %v1178
        %1405 = vmatpush1.bf16.msra.mxu0 %v1177
        %1406 = vmatprep.subr.bf16.mxu0 %v1182
        %1407 = vmatpush1.bf16.msra.mxu0 %v1181
        %1408 = vmatprep.subr.bf16.mxu0 %v1186
        %1409 = vmatpush1.bf16.msra.mxu0 %v1185
        %1410 = vmatprep.subr.bf16.mxu0 %v1190
        %1411 = vmatpush1.bf16.msra.mxu0 %v1189
        %1412 = vmatprep.subr.bf16.mxu0 %v1194
        %1413 = vmatpush1.bf16.msra.mxu0 %v1193
        %1414 = vmatprep.subr.bf16.mxu0 %v1198
        %1415 = vmatpush1.bf16.msra.mxu0 %v1197
        %1416 = vmatprep.subr.bf16.mxu0 %v1202
        %1417 = vmatpush1.bf16.msra.mxu0 %v1201
        %1418 = vmatprep.subr.bf16.mxu0 %v1206
        %1419 = vmatpush1.bf16.msra.mxu0 %v1205
        %1420 = vmatprep.subr.bf16.mxu0 %v1210
        %1421 = vmatpush1.bf16.msra.mxu0 %v1209
        %1422 = vmatprep.subr.bf16.mxu0 %v1214
        %1423 = vmatpush1.bf16.msra.mxu0 %v1213
        %1424 = vmatprep.subr.bf16.mxu0 %v1218
        %1425 = vmatpush1.bf16.msra.mxu0 %v1217
        %1426 = vmatprep.subr.bf16.mxu0 %v1222
        %1427 = vmatpush1.bf16.msra.mxu0 %v1221
        %1428 = vmatprep.mubr.bf16.mxu0 %v708
        %1429 = vmatmul.mubr.bf16.gmra.mrb[0].mxu0 %v707
        %v1430 = vpop.f32.mrb[0].mxu0
        %v1431 = vadd.f32 %v1388, %v1430
        %v1432 = vpop.f32.mrb[0].mxu0
        %v1433 = vadd.f32 %v1390, %v1432
        %v1434 = vpop.f32.mrb[0].mxu0
        %v1435 = vadd.f32 %v1392, %v1434
        %v1436 = vpop.f32.mrb[0].mxu0
        %v1437 = vadd.f32 %v1394, %v1436
        %1438 = vdwg.mxu0
        %1439 = vmatprep.subr.bf16.mxu0 %v1100
        %1440 = vmatpush1.bf16.msra.mxu0 %v1099
        %1441 = vmatprep.subr.bf16.mxu0 %v1104
        %1442 = vmatpush1.bf16.msra.mxu0 %v1103
        %1443 = vmatprep.subr.bf16.mxu0 %v1108
        %1444 = vmatpush1.bf16.msra.mxu0 %v1107
        %1445 = vmatprep.subr.bf16.mxu0 %v1112
        %1446 = vmatpush1.bf16.msra.mxu0 %v1111
        %1447 = vmatprep.subr.bf16.mxu0 %v1116
        %1448 = vmatpush1.bf16.msra.mxu0 %v1115
        %1449 = vmatprep.subr.bf16.mxu0 %v1120
        %1450 = vmatpush1.bf16.msra.mxu0 %v1119
        %1451 = vmatprep.subr.bf16.mxu0 %v1124
        %1452 = vmatpush1.bf16.msra.mxu0 %v1123
        %1453 = vmatprep.subr.bf16.mxu0 %v1128
        %1454 = vmatpush1.bf16.msra.mxu0 %v1127
        %1455 = vmatprep.subr.bf16.mxu0 %v1132
        %1456 = vmatpush1.bf16.msra.mxu0 %v1131
        %1457 = vmatprep.subr.bf16.mxu0 %v1136
        %1458 = vmatpush1.bf16.msra.mxu0 %v1135
        %1459 = vmatprep.subr.bf16.mxu0 %v1140
        %1460 = vmatpush1.bf16.msra.mxu0 %v1139
        %1461 = vmatprep.subr.bf16.mxu0 %v1144
        %1462 = vmatpush1.bf16.msra.mxu0 %v1143
        %1463 = vmatprep.subr.bf16.mxu0 %v1148
        %1464 = vmatpush1.bf16.msra.mxu0 %v1147
        %1465 = vmatprep.subr.bf16.mxu0 %v1152
        %1466 = vmatpush1.bf16.msra.mxu0 %v1151
        %1467 = vmatprep.subr.bf16.mxu0 %v1156
        %1468 = vmatpush1.bf16.msra.mxu0 %v1155
        %1469 = vmatprep.subr.bf16.mxu0 %v1160
        %1470 = vmatpush1.bf16.msra.mxu0 %v1159
        %1471 = vmatprep.mubr.bf16.mxu0 %v706
        %1472 = vmatmul.mubr.bf16.gmra.mrb[0].mxu0 %v705
        %v1473 = vpop.f32.mrb[0].mxu0
        %v1474 = vadd.f32 0.0, %v1473
        %v1475 = vpop.f32.mrb[0].mxu0
        %v1476 = vadd.f32 0.0, %v1475
        %v1477 = vpop.f32.mrb[0].mxu0
        %v1478 = vadd.f32 0.0, %v1477
        %v1479 = vpop.f32.mrb[0].mxu0
        %v1480 = vadd.f32 0.0, %v1479
        %1481 = vdwg.mxu0
        %1482 = vmatprep.subr.bf16.mxu0 %v1164
        %1483 = vmatpush1.bf16.msra.mxu0 %v1163
        %1484 = vmatprep.subr.bf16.mxu0 %v1168
        %1485 = vmatpush1.bf16.msra.mxu0 %v1167
        %1486 = vmatprep.subr.bf16.mxu0 %v1172
        %1487 = vmatpush1.bf16.msra.mxu0 %v1171
        %1488 = vmatprep.subr.bf16.mxu0 %v1176
        %1489 = vmatpush1.bf16.msra.mxu0 %v1175
        %1490 = vmatprep.subr.bf16.mxu0 %v1180
        %1491 = vmatpush1.bf16.msra.mxu0 %v1179
        %1492 = vmatprep.subr.bf16.mxu0 %v1184
        %1493 = vmatpush1.bf16.msra.mxu0 %v1183
        %1494 = vmatprep.subr.bf16.mxu0 %v1188
        %1495 = vmatpush1.bf16.msra.mxu0 %v1187
        %1496 = vmatprep.subr.bf16.mxu0 %v1192
        %1497 = vmatpush1.bf16.msra.mxu0 %v1191
        %1498 = vmatprep.subr.bf16.mxu0 %v1196
        %1499 = vmatpush1.bf16.msra.mxu0 %v1195
        %1500 = vmatprep.subr.bf16.mxu0 %v1200
        %1501 = vmatpush1.bf16.msra.mxu0 %v1199
        %1502 = vmatprep.subr.bf16.mxu0 %v1204
        %1503 = vmatpush1.bf16.msra.mxu0 %v1203
        %1504 = vmatprep.subr.bf16.mxu0 %v1208
        %1505 = vmatpush1.bf16.msra.mxu0 %v1207
        %1506 = vmatprep.subr.bf16.mxu0 %v1212
        %1507 = vmatpush1.bf16.msra.mxu0 %v1211
        %1508 = vmatprep.subr.bf16.mxu0 %v1216
        %1509 = vmatpush1.bf16.msra.mxu0 %v1215
        %1510 = vmatprep.subr.bf16.mxu0 %v1220
        %1511 = vmatpush1.bf16.msra.mxu0 %v1219
        %1512 = vmatprep.subr.bf16.mxu0 %v1224
        %1513 = vmatpush1.bf16.msra.mxu0 %v1223
        %1514 = vmatprep.mubr.bf16.mxu0 %v708
        %1515 = vmatmul.mubr.bf16.gmra.mrb[0].mxu0 %v707
        %v1516 = vpop.f32.mrb[0].mxu0
        %v1517 = vadd.f32 %v1474, %v1516
        %v1518 = vpop.f32.mrb[0].mxu0
        %v1519 = vadd.f32 %v1476, %v1518
        %v1520 = vpop.f32.mrb[0].mxu0
        %v1521 = vadd.f32 %v1478, %v1520
        %v1522 = vpop.f32.mrb[0].mxu0
        %v1523 = vadd.f32 %v1480, %v1522
        %1524 = vdwg.mxu0
        %v1525 = vadd.f32 %v553, %v1431
        %v1526 = vadd.f32 %v554, %v1433
        %v1527 = vadd.f32 %v555, %v1517
        %v1528 = vadd.f32 %v556, %v1519
        %v1529 = vadd.f32 %v557, %v1435
        %v1530 = vadd.f32 %v558, %v1437
        %v1531 = vadd.f32 %v559, %v1521
        %v1532 = vadd.f32 %v560, %v1523
        %1533 = vst [vmem:[#allocation2] sm:$0xff] %v1525
        %1534 = vst [vmem:[#allocation2 + $0x8] sm:$0xff] %v1526
        %1535 = vst [vmem:[#allocation2 + $0x10] sm:$0xff] %v1527
        %1536 = vst [vmem:[#allocation2 + $0x18] sm:$0xff] %v1528
        %1537 = vst [vmem:[#allocation2 + $0x20] sm:$0xff] %v1529
        %1538 = vst [vmem:[#allocation2 + $0x28] sm:$0xff] %v1530
        %1539 = vst [vmem:[#allocation2 + $0x30] sm:$0xff] %v1531
        %1540 = vst [vmem:[#allocation2 + $0x38] sm:$0xff] %v1532
        %p1541 = scmp.eq.s32.totalorder %s21, 1
        // Predicated region
        $region83: #{double_fc_pallas.1} parent=69 // pred_check
          %p1542 = pneg %p1541
        $region84: #{double_fc_pallas.1} parent=69 // pred_check_branch
          %1544 = sbr.rel (%p1542) target = $region86
        $region85: #{double_fc_pallas.1} parent=69 // pred_region
          %v1545 = vld [vmem:[#allocation2] sm:$0xff]
          %v1546 = vld [vmem:[#allocation2 + $0x8] sm:$0xff]
          %v1547 = vld [vmem:[#allocation2 + $0x10] sm:$0xff]
          %v1548 = vld [vmem:[#allocation2 + $0x18] sm:$0xff]
          %v1549 = vld [vmem:[#allocation2 + $0x20] sm:$0xff]
          %v1550 = vld [vmem:[#allocation2 + $0x28] sm:$0xff]
          %v1551 = vld [vmem:[#allocation2 + $0x30] sm:$0xff]
          %v1552 = vld [vmem:[#allocation2 + $0x38] sm:$0xff]
          %v1553 = vld [vmem:[%s537] sm:$0xf]
          %v1555 = vlaneseq
          %v1556 = vshrl.u32 %v1555, 7
          %v1557 = vsub.s32 0, %v1556
          %v1558 = vrot.slane %v1553, %v1557
          %v1559 = vlaneseq
          %v1560 = vshrl.u32 %v1559, 7
          %v1561 = vsub.s32 1, %v1560
          %v1562 = vrot.slane %v1553, %v1561
          %v1563 = vlaneseq
          %v1564 = vshrl.u32 %v1563, 7
          %v1565 = vsub.s32 2, %v1564
          %v1566 = vrot.slane %v1553, %v1565
          %v1567 = vlaneseq
          %v1568 = vshrl.u32 %v1567, 7
          %v1569 = vsub.s32 3, %v1568
          %v1570 = vrot.slane %v1553, %v1569
          %v1575 = vadd.f32 %v1545, %v1558
          %v1576 = vadd.f32 %v1546, %v1562
          %v1577 = vadd.f32 %v1547, %v1566
          %v1578 = vadd.f32 %v1548, %v1570
          %v1579 = vadd.f32 %v1549, %v1558
          %v1580 = vadd.f32 %v1550, %v1562
          %v1581 = vadd.f32 %v1551, %v1566
          %v1582 = vadd.f32 %v1552, %v1570
          %v1583 = vmax.f32 %v1575, 0.0
          %v1584 = vmax.f32 %v1576, 0.0
          %v1585 = vmax.f32 %v1577, 0.0
          %v1586 = vmax.f32 %v1578, 0.0
          %v1587 = vmax.f32 %v1579, 0.0
          %v1588 = vmax.f32 %v1580, 0.0
          %v1589 = vmax.f32 %v1581, 0.0
          %v1590 = vmax.f32 %v1582, 0.0
          %1591 = vst [vmem:[%s529] sm:$0xff] %v1583
          %1592 = vst [vmem:[%s529 + $0x8] sm:$0xff] %v1584
          %1593 = vst [vmem:[%s529 + $0x10] sm:$0xff] %v1585
          %1594 = vst [vmem:[%s529 + $0x18] sm:$0xff] %v1586
          %1595 = vst [vmem:[%s529 + $0x20] sm:$0xff] %v1587
          %1596 = vst [vmem:[%s529 + $0x28] sm:$0xff] %v1588
          %1597 = vst [vmem:[%s529 + $0x30] sm:$0xff] %v1589
          %1598 = vst [vmem:[%s529 + $0x38] sm:$0xff] %v1590
        $region86: #{double_fc_pallas.1} parent=69 // pred_fallthru
          _
        %s1599 = sand.u32 %s125, 1
        %s1600 = sand.u32 %s125, 1
        %s1601 = smul.addr %s1600, 64
        %s1602 = scalar_lea.vmem [#allocation5], %s1601
        // Predicated region
        $region87: #{double_fc_pallas.1} parent=69 // pred_check
          %p1603 = pneg %p135
        $region88: #{double_fc_pallas.1} parent=69 // pred_check_branch
          %1605 = sbr.rel (%p1603) target = $region90
        $region89: #{double_fc_pallas.1} parent=69 // pred_region
          %s1606 = smul.u32 2, %s19
          %s1607 = smul.u32 4, %s20
          %s1608 = smul.addr %s1606, 16
          %s1609 = sadd.s32 %s1607, %s1608
          %s1610 = smul.addr %s1609, 8
          %s1611 = scalar_lea.vmem %s3, %s1610
          // Predicated region
          $region91: #{double_fc_pallas.1} parent=89 // pred_check
            _
          $region92: #{double_fc_pallas.1} parent=89 // pred_check_branch
            %1613 = sbr.rel (0) target = $region94
          $region93: #{double_fc_pallas.1} parent=89 // pred_region
            // Predicated region
            $region95: #{double_fc_pallas.1} parent=93 // pred_check
              _
            $region96: #{double_fc_pallas.1} parent=93 // pred_check_branch
              %1615 = sbr.rel (0) target = $region98
            $region97: #{double_fc_pallas.1} parent=93 // pred_region
              loop: start=0, step=1, limit=1
              $region99: #{double_fc_pallas.1} parent=97 // loop_pre_header
                _
              $region100: #{double_fc_pallas.1} parent=97 // loop_header
                %s1617 = sphi 0, %s1621
                %p1618 = scmp.ge.s32.totalorder %s1617, 1
                %s1622 = sphi %s1602, %s1602
                %s1623 = sphi %s1611, %s1611
              $region101: #{double_fc_pallas.1} parent=97 // loop_header_branch
                %1620 = sbr.rel (%p1618) target = $region105
              $region102: #{double_fc_pallas.1} parent=97 // loop_body
                %v1624 = vld [vmem:[%s1622] sm:$0xff]
                %1625 = vst [vmem:[%s1623] sm:$0xff] %v1624
                %v1626 = vld [vmem:[%s1622 + $0x8] sm:$0xff]
                %1627 = vst [vmem:[%s1623 + $0x8] sm:$0xff] %v1626
                %v1628 = vld [vmem:[%s1622 + $0x10] sm:$0xff]
                %1629 = vst [vmem:[%s1623 + $0x10] sm:$0xff] %v1628
                %v1630 = vld [vmem:[%s1622 + $0x18] sm:$0xff]
                %1631 = vst [vmem:[%s1623 + $0x18] sm:$0xff] %v1630
                %v1632 = vld [vmem:[%s1622 + $0x20] sm:$0xff]
                %1633 = vst [vmem:[%s1623 + $0x80] sm:$0xff] %v1632
                %v1634 = vld [vmem:[%s1622 + $0x28] sm:$0xff]
                %1635 = vst [vmem:[%s1623 + $0x88] sm:$0xff] %v1634
                %v1636 = vld [vmem:[%s1622 + $0x30] sm:$0xff]
                %1637 = vst [vmem:[%s1623 + $0x90] sm:$0xff] %v1636
                %v1638 = vld [vmem:[%s1622 + $0x38] sm:$0xff]
                %1639 = vst [vmem:[%s1623 + $0x98] sm:$0xff] %v1638
              $region103: #{double_fc_pallas.1} parent=97 // loop_footer
                %s1621 = sadd.s32 1, %s1617
              $region104: #{double_fc_pallas.1} parent=97 // loop_footer_branch
                %1616 = sbr.rel target = $region100
              $region105: #{double_fc_pallas.1} parent=97 // loop_exit
                _
            $region98: #{double_fc_pallas.1} parent=93 // pred_fallthru
              _
            // Predicated region
            $region106: #{double_fc_pallas.1} parent=93 // pred_check
              _
            $region107: #{double_fc_pallas.1} parent=93 // pred_check_branch
              %1641 = sbr.rel target = $region109
            $region108: #{double_fc_pallas.1} parent=93 // pred_region
              _
            $region109: #{double_fc_pallas.1} parent=93 // pred_fallthru
              _
          $region94: #{double_fc_pallas.1} parent=89 // pred_fallthru
            _
          %1642 = vnop
        $region90: #{double_fc_pallas.1} parent=69 // pred_fallthru
          _
      $region70: #{double_fc_pallas.1} parent=5 // pred_fallthru
        _
      %p1643 = scmp.le.s32.totalorder 2, %s9
      // Predicated region
      $region110: #{double_fc_pallas.1} parent=5 // pred_check
        %p1644 = pneg %p1643
      $region111: #{double_fc_pallas.1} parent=5 // pred_check_branch
        %1646 = sbr.rel (%p1644) target = $region113
      $region112: #{double_fc_pallas.1} parent=5 // pred_region
        %s1647 = ssub.s32 %s9, 2
        // Predicated region
        $region114: #{double_fc_pallas.1} parent=112 // pred_check
          %p1648 = pneg %p141
        $region115: #{double_fc_pallas.1} parent=112 // pred_check_branch
          %1650 = sbr.rel (%p1648) target = $region117
        $region116: #{double_fc_pallas.1} parent=112 // pred_region
          %s1651 = sand.u32 %s126, 1
          %s1652 = sand.u32 %s126, 1
          %s1653 = smul.addr %s1652, 64
          %s1654 = scalar_lea.vmem [#allocation5], %s1653
        $region117: #{double_fc_pallas.1} parent=112 // pred_fallthru
          _
      $region113: #{double_fc_pallas.1} parent=5 // pred_fallthru
        _
    $region6: #{double_fc_pallas.1} parent=1 // loop_footer
      %s13 = sadd.s32 1, %s9
    $region7: #{double_fc_pallas.1} parent=1 // loop_footer_branch
      %8 = sbr.rel target = $region3
    $region8: #{double_fc_pallas.1} parent=1 // loop_exit
      _

</llo_original>
